<compile_context>
chip_gen: v5e
topology: v5e:2x2
jax: 0.10.0
libtpu: 0.0.40
codegen_flags: <defaults>
</compile_context>

<pallas_src>
import math
import functools

import jax
import jax.numpy as jnp
from jax import lax
from jax.experimental import pallas as pl
from jax.experimental.pallas import tpu as pltpu


_VMEM_LIMIT = 48 * 1024 * 1024  # conservative: fits v5e/v6e (128 MiB) and v7x (64 MiB)


def _choose_tile(m, target=512):
    """Largest token-tile <= target that divides m (keeps blocks exact)."""
    if m <= target:
        return m
    for t in (512, 384, 256, 128, 64, 32, 16, 8):
        if m % t == 0:
            return t
    return m


# ------------------------- fused multi-head attention ------------------------

def _mha_kernel(xq_ref, xkv_ref, pad_ref,
                wq_ref, bq_ref, wkv_ref, bkv_ref,
                wo_ref, bo_ref, g_ref, beta_ref,
                o_ref, *, n_heads, d_k, causal):
    # one batch element per grid step
    xq = xq_ref[0]                      # (Sq, D)  f32
    xkv = xkv_ref[0]                    # (Sk, D)  f32
    Sq, D = xq.shape
    Sk = xkv.shape[0]

    # fused projections: bf16 operands on the MXU, f32 accumulate
    q = jnp.dot(xq.astype(jnp.bfloat16), wq_ref[...],
                preferred_element_type=jnp.float32) + bq_ref[...]       # (Sq, D)
    kv = jnp.dot(xkv.astype(jnp.bfloat16), wkv_ref[...],
                 preferred_element_type=jnp.float32) + bkv_ref[...]     # (Sk, 2D)

    # mask (True => masked), from compact pad row (+ in-kernel causal triangle)
    masked = jnp.broadcast_to(pad_ref[0] > 0.5, (Sq, Sk))               # (Sq, Sk)
    if causal:
        rows = lax.broadcasted_iota(jnp.int32, (Sq, Sk), 0)
        cols = lax.broadcasted_iota(jnp.int32, (Sq, Sk), 1)
        masked = jnp.logical_or(masked, cols > rows)

    scale = 1.0 / math.sqrt(d_k)
    # output projection bias + residual, accumulated in f32
    out_acc = bo_ref[...] + xq                                          # (Sq, D)

    # contract feature dim of q against feature dim of k (no explicit .T)
    dnums = (((1,), (1,)), ((), ()))
    for h in range(n_heads):
        lo = h * d_k
        qh = q[:, lo:lo + d_k].astype(jnp.bfloat16)                     # (Sq, dk)
        kh = kv[:, lo:lo + d_k].astype(jnp.bfloat16)                    # (Sk, dk)
        vh = kv[:, D + lo:D + lo + d_k].astype(jnp.bfloat16)            # (Sk, dk)

        s = lax.dot_general(qh, kh, dnums,
                            preferred_element_type=jnp.float32) * scale  # (Sq, Sk)
        s = jnp.where(masked, -1e9, s)          # masked_fill_(mask, -1e9) semantics
        m = jnp.max(s, axis=-1, keepdims=True)
        e = jnp.exp(s - m)
        denom = jnp.sum(e, axis=-1, keepdims=True)
        p = (e * pl.reciprocal(denom, approx=True)).astype(jnp.bfloat16)

        ctx_h = jnp.dot(p, vh, preferred_element_type=jnp.float32)      # (Sq, dk)
        # ctx @ Wo = sum_h ctx_h @ Wo[h*dk:(h+1)*dk, :]  (keeps output lane-dense)
        out_acc = out_acc + jnp.dot(
            ctx_h.astype(jnp.bfloat16), wo_ref[lo:lo + d_k, :],
            preferred_element_type=jnp.float32)                          # (Sq, D)

    # LayerNorm (f32 statistics, eps = 1e-5 like nn.LayerNorm)
    mean = jnp.mean(out_acc, axis=-1, keepdims=True)
    var = jnp.mean((out_acc - mean) ** 2, axis=-1, keepdims=True)
    o_ref[0] = (out_acc - mean) * lax.rsqrt(var + 1e-5) * g_ref[...] + beta_ref[...]


def multihead_attention(p, x_q, x_kv, pad_mask, n_heads, causal):
    # x_q: (B, Sq, D), x_kv: (B, Sk, D), pad_mask: (B, 1, Sk) f32 (1.0 => pad key)
    B, Sq, D = x_q.shape
    Sk = x_kv.shape[1]
    d_k = D // n_heads

    wq = p["Wq"].astype(jnp.bfloat16)
    wkv = jnp.concatenate([p["Wk"], p["Wv"]], axis=1).astype(jnp.bfloat16)   # (D, 2D)
    bkv = jnp.concatenate([p["bk"], p["bv"]], axis=1)                        # (1, 2D)
    wo = p["Wo"].astype(jnp.bfloat16)

    kern = functools.partial(_mha_kernel, n_heads=n_heads, d_k=d_k, causal=causal)

    flops = 2 * B * (Sq * D * D + Sk * D * 2 * D
                     + n_heads * Sq * Sk * d_k * 2 + Sq * D * D)
    transcend = B * n_heads * Sq * Sk
    bytes_accessed = (4 * (x_q.size + x_kv.size + pad_mask.size + B * Sq * D)
                      + 2 * (wq.size + wkv.size + wo.size))

    return pl.pallas_call(
        kern,
        out_shape=jax.ShapeDtypeStruct((B, Sq, D), jnp.float32),
        grid=(B,),
        in_specs=[
            pl.BlockSpec((1, Sq, D), lambda b: (b, 0, 0)),     # x_q
            pl.BlockSpec((1, Sk, D), lambda b: (b, 0, 0)),     # x_kv
            pl.BlockSpec((1, 1, Sk), lambda b: (b, 0, 0)),     # compact pad mask
            pl.BlockSpec((D, D), lambda b: (0, 0)),            # Wq (resident)
            pl.BlockSpec((1, D), lambda b: (0, 0)),            # bq
            pl.BlockSpec((D, 2 * D), lambda b: (0, 0)),        # W_kv (resident)
            pl.BlockSpec((1, 2 * D), lambda b: (0, 0)),        # b_kv
            pl.BlockSpec((D, D), lambda b: (0, 0)),            # Wo (resident)
            pl.BlockSpec((1, D), lambda b: (0, 0)),            # bo
            pl.BlockSpec((1, D), lambda b: (0, 0)),            # ln gamma
            pl.BlockSpec((1, D), lambda b: (0, 0)),            # ln beta
        ],
        out_specs=pl.BlockSpec((1, Sq, D), lambda b: (b, 0, 0)),
        compiler_params=pltpu.CompilerParams(
            dimension_semantics=("parallel",),
            vmem_limit_bytes=_VMEM_LIMIT),
        cost_estimate=pl.CostEstimate(flops=int(flops),
                                      transcendentals=int(transcend),
                                      bytes_accessed=int(bytes_accessed)),
    )(x_q, x_kv, pad_mask, wq, p["bq"], wkv, bkv, wo, p["bo"], p["ln_g"], p["ln_b"])


# ---------------------------- fused position-wise FFN ------------------------

def _ffn_kernel(x_ref, w1_ref, b1_ref, w2_ref, b2_ref, g_ref, beta_ref, o_ref):
    # LayerNorm( relu(x @ W1 + b1) @ W2 + b2 + x ), per token tile
    x = x_ref[...]                                                   # (tm, D) f32
    h = jnp.dot(x.astype(jnp.bfloat16), w1_ref[...],
                preferred_element_type=jnp.float32) + b1_ref[...]
    h = jnp.maximum(h, 0.0)
    y = jnp.dot(h.astype(jnp.bfloat16), w2_ref[...],
                preferred_element_type=jnp.float32) + b2_ref[...] + x
    mean = jnp.mean(y, axis=-1, keepdims=True)
    var = jnp.mean((y - mean) ** 2, axis=-1, keepdims=True)
    o_ref[...] = (y - mean) * lax.rsqrt(var + 1e-5) * g_ref[...] + beta_ref[...]


def ffn(p, x):
    B, S, D = x.shape
    M = B * S
    dff = p["W1"].shape[1]
    tm = _choose_tile(M)

    w1 = p["W1"].astype(jnp.bfloat16)
    w2 = p["W2"].astype(jnp.bfloat16)

    flops = 2 * M * D * dff * 2
    bytes_accessed = 4 * (2 * M * D) + 2 * (w1.size + w2.size)

    y = pl.pallas_call(
        _ffn_kernel,
        out_shape=jax.ShapeDtypeStruct((M, D), jnp.float32),
        grid=(M // tm,),
        in_specs=[
            pl.BlockSpec((tm, D), lambda i: (i, 0)),            # x tile
            pl.BlockSpec((D, dff), lambda i: (0, 0)),           # W1 (resident)
            pl.BlockSpec((1, dff), lambda i: (0, 0)),
            pl.BlockSpec((dff, D), lambda i: (0, 0)),           # W2 (resident)
            pl.BlockSpec((1, D), lambda i: (0, 0)),
            pl.BlockSpec((1, D), lambda i: (0, 0)),
            pl.BlockSpec((1, D), lambda i: (0, 0)),
        ],
        out_specs=pl.BlockSpec((tm, D), lambda i: (i, 0)),
        compiler_params=pltpu.CompilerParams(
            dimension_semantics=("parallel",),
            vmem_limit_bytes=_VMEM_LIMIT),
        cost_estimate=pl.CostEstimate(flops=int(flops), transcendentals=0,
                                      bytes_accessed=int(bytes_accessed)),
    )(x.reshape(M, D), w1, p["b1"], w2, p["b2"], p["ln_g"], p["ln_b"])
    return y.reshape(B, S, D)


# ----------------------------- model glue (JAX) -------------------------------

def positional_encoding(max_len, d_model):
    position = jnp.arange(max_len, dtype=jnp.float32)[:, None]
    div_term = jnp.exp(
        jnp.arange(0, d_model, 2, dtype=jnp.float32) * -(math.log(10000.0) / d_model)
    )
    pe = jnp.zeros((max_len, d_model), dtype=jnp.float32)
    pe = pe.at[:, 0::2].set(jnp.sin(position * div_term))
    pe = pe.at[:, 1::2].set(jnp.cos(position * div_term))
    return pe


def decoder_forward(params, enc_inputs, dec_inputs, enc_outputs, pad_idx, n_heads):
    B, S = dec_inputs.shape
    D = params["embedding"].shape[1]

    # embedding + positional encoding (glue, plain JAX)
    x = params["embedding"][dec_inputs] + params["pe"][:S][None, :, :]

    # compact pad masks only (B,1,Sk); causal triangle is built inside the kernel
    self_pad = (dec_inputs == pad_idx).astype(jnp.float32)[:, None, :]   # (B,1,S)
    enc_pad = (enc_inputs == pad_idx).astype(jnp.float32)[:, None, :]    # (B,1,Se)

    for lp in params["layers"]:
        x = multihead_attention(lp["self_attn"], x, x, self_pad, n_heads, causal=True)
        x = multihead_attention(lp["enc_attn"], x, enc_outputs, enc_pad, n_heads,
                                causal=False)
        x = ffn(lp["ffn"], x)
    return x


# -------------------------------- param init ---------------------------------

def init_attn_params(key, d_model):
    ks = jax.random.split(key, 4)

    def lin(k, din, dout):
        return 0.02 * jax.random.normal(k, (din, dout), jnp.float32)

    return {
        "Wq": lin(ks[0], d_model, d_model), "bq": jnp.zeros((1, d_model), jnp.float32),
        "Wk": lin(ks[1], d_model, d_model), "bk": jnp.zeros((1, d_model), jnp.float32),
        "Wv": lin(ks[2], d_model, d_model), "bv": jnp.zeros((1, d_model), jnp.float32),
        "Wo": lin(ks[3], d_model, d_model), "bo": jnp.zeros((1, d_model), jnp.float32),
        "ln_g": jnp.ones((1, d_model), jnp.float32),
        "ln_b": jnp.zeros((1, d_model), jnp.float32),
    }


def init_ffn_params(key, d_model, d_ff):
    k1, k2 = jax.random.split(key)
    return {
        "W1": 0.02 * jax.random.normal(k1, (d_model, d_ff), jnp.float32),
        "b1": jnp.zeros((1, d_ff), jnp.float32),
        "W2": 0.02 * jax.random.normal(k2, (d_ff, d_model), jnp.float32),
        "b2": jnp.zeros((1, d_model), jnp.float32),
        "ln_g": jnp.ones((1, d_model), jnp.float32),
        "ln_b": jnp.zeros((1, d_model), jnp.float32),
    }


def init_decoder_params(key, vocab_size, d_model, d_ff, n_layers, max_len):
    keys = jax.random.split(key, n_layers * 3 + 1)
    layers = []
    for l in range(n_layers):
        layers.append(
            {
                "self_attn": init_attn_params(keys[3 * l + 0], d_model),
                "enc_attn": init_attn_params(keys[3 * l + 1], d_model),
                "ffn": init_ffn_params(keys[3 * l + 2], d_model, d_ff),
            }
        )
    return {
        "embedding": 0.02 * jax.random.normal(keys[-1], (vocab_size, d_model), jnp.float32),
        "pe": positional_encoding(max_len, d_model),
        "layers": layers,
    }


# ----------------------------------- main -------------------------------------

if __name__ == "__main__":
    # small config consistent with the module's __init__
    batch = 2
    dec_len = 8
    enc_len = 8
    d_model = 32
    n_heads = 4
    d_ff = 64
    n_layers = 2
    vocab_size = 50
    max_len = 16
    pad_idx = 0

    root = jax.random.PRNGKey(0)
    k_par, k_dec, k_enc, k_out = jax.random.split(root, 4)

    params = init_decoder_params(k_par, vocab_size, d_model, d_ff, n_layers, max_len)

    dec_inputs = jax.random.randint(k_dec, (batch, dec_len), 1, vocab_size, jnp.int32)
    enc_inputs = jax.random.randint(k_enc, (batch, enc_len), 1, vocab_size, jnp.int32)
    # introduce some padding so the pad masks are exercised
    dec_inputs = dec_inputs.at[0, -2:].set(pad_idx)
    enc_inputs = enc_inputs.at[1, -3:].set(pad_idx)
    enc_outputs = jax.random.normal(k_out, (batch, enc_len, d_model), jnp.float32)

    out = decoder_forward(params, enc_inputs, dec_inputs, enc_outputs, pad_idx, n_heads)
    out = jax.block_until_ready(out)
    assert out.shape == (batch, dec_len, d_model)
    assert bool(jnp.all(jnp.isfinite(out)))
    print("KERNEL_OK")
</pallas_src>

<mosaic_0001>
module attributes {stable_mosaic.version = 11 : i64} {
  func.func @_mha_kernel(%arg0: i32, %arg1: memref<1x8x32xf32, #tpu.memory_space<vmem>>, %arg2: memref<1x8x32xf32, #tpu.memory_space<vmem>>, %arg3: memref<1x1x8xf32, #tpu.memory_space<vmem>>, %arg4: memref<32x32xbf16, #tpu.memory_space<vmem>>, %arg5: memref<1x32xf32, #tpu.memory_space<vmem>>, %arg6: memref<32x64xbf16, #tpu.memory_space<vmem>>, %arg7: memref<1x64xf32, #tpu.memory_space<vmem>>, %arg8: memref<32x32xbf16, #tpu.memory_space<vmem>>, %arg9: memref<1x32xf32, #tpu.memory_space<vmem>>, %arg10: memref<1x32xf32, #tpu.memory_space<vmem>>, %arg11: memref<1x32xf32, #tpu.memory_space<vmem>>, %arg12: memref<1x8x32xf32, #tpu.memory_space<vmem>>) attributes {dimension_semantics = [#tpu.dimension_semantics<parallel>], iteration_bounds = array<i64: 2>, scalar_prefetch = 0 : i64, scratch_operands = 0 : i64, tpu.core_type = #tpu.core_type<tc>, window_params = [{transform_indices = @transform_0, window_bounds = array<i64: 1, 8, 32>}, {transform_indices = @transform_1, window_bounds = array<i64: 1, 8, 32>}, {transform_indices = @transform_2, window_bounds = array<i64: 1, 1, 8>}, {pipeline_mode = #tpu.pipeline_mode<synchronous>, transform_indices = @transform_3, window_bounds = array<i64: 32, 32>}, {pipeline_mode = #tpu.pipeline_mode<synchronous>, transform_indices = @transform_4, window_bounds = array<i64: 1, 32>}, {pipeline_mode = #tpu.pipeline_mode<synchronous>, transform_indices = @transform_5, window_bounds = array<i64: 32, 64>}, {pipeline_mode = #tpu.pipeline_mode<synchronous>, transform_indices = @transform_6, window_bounds = array<i64: 1, 64>}, {pipeline_mode = #tpu.pipeline_mode<synchronous>, transform_indices = @transform_7, window_bounds = array<i64: 32, 32>}, {pipeline_mode = #tpu.pipeline_mode<synchronous>, transform_indices = @transform_8, window_bounds = array<i64: 1, 32>}, {pipeline_mode = #tpu.pipeline_mode<synchronous>, transform_indices = @transform_9, window_bounds = array<i64: 1, 32>}, {pipeline_mode = #tpu.pipeline_mode<synchronous>, transform_indices = @transform_10, window_bounds = array<i64: 1, 32>}, {transform_indices = @transform_11, window_bounds = array<i64: 1, 8, 32>}]} {
    %c0 = arith.constant 0 : index
    %c0_0 = arith.constant 0 : index
    %c0_1 = arith.constant 0 : index
    %0 = vector.load %arg1[%c0, %c0_0, %c0_1] : memref<1x8x32xf32, #tpu.memory_space<vmem>>, vector<1x8x32xf32>
    %1 = vector.shape_cast %0 : vector<1x8x32xf32> to vector<8x32xf32>
    %c0_2 = arith.constant 0 : index
    %c0_3 = arith.constant 0 : index
    %c0_4 = arith.constant 0 : index
    %2 = vector.load %arg2[%c0_2, %c0_3, %c0_4] : memref<1x8x32xf32, #tpu.memory_space<vmem>>, vector<1x8x32xf32>
    %3 = vector.shape_cast %2 : vector<1x8x32xf32> to vector<8x32xf32>
    %4 = arith.truncf %1 : vector<8x32xf32> to vector<8x32xbf16>
    %c0_5 = arith.constant 0 : index
    %c0_6 = arith.constant 0 : index
    %5 = vector.load %arg4[%c0_5, %c0_6] : memref<32x32xbf16, #tpu.memory_space<vmem>>, vector<32x32xbf16>
    %cst = arith.constant dense<0.000000e+00> : vector<8x32xf32>
    %6 = tpu.matmul %4, %5, %cst {dimension_numbers = #tpu.dot_dimension_numbers<[1], [0], [0], [1], [0, 0, 1, 1], [], []>} : vector<8x32xbf16>, vector<32x32xbf16>, vector<8x32xf32> -> vector<8x32xf32>
    %c0_7 = arith.constant 0 : index
    %c0_8 = arith.constant 0 : index
    %7 = vector.load %arg5[%c0_7, %c0_8] : memref<1x32xf32, #tpu.memory_space<vmem>>, vector<1x32xf32>
    %8 = vector.broadcast %7 : vector<1x32xf32> to vector<8x32xf32>
    %9 = arith.addf %6, %8 : vector<8x32xf32>
    %10 = arith.truncf %3 : vector<8x32xf32> to vector<8x32xbf16>
    %c0_9 = arith.constant 0 : index
    %c0_10 = arith.constant 0 : index
    %11 = vector.load %arg6[%c0_9, %c0_10] : memref<32x64xbf16, #tpu.memory_space<vmem>>, vector<32x64xbf16>
    %cst_11 = arith.constant dense<0.000000e+00> : vector<8x64xf32>
    %12 = tpu.matmul %10, %11, %cst_11 {dimension_numbers = #tpu.dot_dimension_numbers<[1], [0], [0], [1], [0, 0, 1, 1], [], []>} : vector<8x32xbf16>, vector<32x64xbf16>, vector<8x64xf32> -> vector<8x64xf32>
    %c0_12 = arith.constant 0 : index
    %c0_13 = arith.constant 0 : index
    %13 = vector.load %arg7[%c0_12, %c0_13] : memref<1x64xf32, #tpu.memory_space<vmem>>, vector<1x64xf32>
    %14 = vector.broadcast %13 : vector<1x64xf32> to vector<8x64xf32>
    %15 = arith.addf %12, %14 : vector<8x64xf32>
    %c0_14 = arith.constant 0 : index
    %c0_15 = arith.constant 0 : index
    %c0_16 = arith.constant 0 : index
    %16 = vector.load %arg3[%c0_14, %c0_15, %c0_16] : memref<1x1x8xf32, #tpu.memory_space<vmem>>, vector<1x1x8xf32>
    %17 = vector.shape_cast %16 : vector<1x1x8xf32> to vector<1x8xf32>
    %cst_17 = arith.constant 5.000000e-01 : f32
    %18 = vector.broadcast %cst_17 : f32 to vector<1x8xf32>
    %19 = arith.cmpf ogt, %17, %18 : vector<1x8xf32>
    %20 = vector.shape_cast %19 : vector<1x8xi1> to vector<1x8xi1>
    %21 = vector.broadcast %20 : vector<1x8xi1> to vector<8x8xi1>
    %22 = tpu.iota {dimensions = array<i32: 0>} : vector<8x8xi32>
    %23 = tpu.iota {dimensions = array<i32: 1>} : vector<8x8xi32>
    %24 = arith.cmpi sgt, %23, %22 : vector<8x8xi32>
    %25 = arith.ori %21, %24 : vector<8x8xi1>
    %c0_18 = arith.constant 0 : index
    %c0_19 = arith.constant 0 : index
    %26 = vector.load %arg9[%c0_18, %c0_19] : memref<1x32xf32, #tpu.memory_space<vmem>>, vector<1x32xf32>
    %27 = vector.broadcast %26 : vector<1x32xf32> to vector<8x32xf32>
    %28 = arith.addf %27, %1 : vector<8x32xf32>
    %29 = vector.extract_strided_slice %9 {offsets = [0, 0], sizes = [8, 8], strides = [1, 1]} : vector<8x32xf32> to vector<8x8xf32>
    %30 = arith.truncf %29 : vector<8x8xf32> to vector<8x8xbf16>
    %31 = vector.extract_strided_slice %15 {offsets = [0, 0], sizes = [8, 8], strides = [1, 1]} : vector<8x64xf32> to vector<8x8xf32>
    %32 = arith.truncf %31 : vector<8x8xf32> to vector<8x8xbf16>
    %33 = vector.extract_strided_slice %15 {offsets = [0, 32], sizes = [8, 8], strides = [1, 1]} : vector<8x64xf32> to vector<8x8xf32>
    %34 = arith.truncf %33 : vector<8x8xf32> to vector<8x8xbf16>
    %cst_20 = arith.constant dense<0.000000e+00> : vector<8x8xf32>
    %35 = tpu.matmul %30, %32, %cst_20 {dimension_numbers = #tpu.dot_dimension_numbers<[1], [1], [0], [0], [0, 0, 1, 0], [], []>} : vector<8x8xbf16>, vector<8x8xbf16>, vector<8x8xf32> -> vector<8x8xf32>
    %cst_21 = arith.constant 0.353553385 : f32
    %36 = vector.broadcast %cst_21 : f32 to vector<8x8xf32>
    %37 = arith.mulf %35, %36 : vector<8x8xf32>
    %cst_22 = arith.constant -1.000000e+09 : f32
    %38 = vector.broadcast %cst_22 : f32 to vector<8x8xf32>
    %39 = arith.select %25, %38, %37 : vector<8x8xi1>, vector<8x8xf32>
    %cst_23 = arith.constant dense<0xFF800000> : vector<8xf32>
    %40 = vector.multi_reduction <maximumf>, %39, %cst_23 [1] : vector<8x8xf32> to vector<8xf32>
    %41 = vector.shape_cast %40 : vector<8xf32> to vector<8x1xf32>
    %42 = vector.broadcast %41 : vector<8x1xf32> to vector<8x8xf32>
    %43 = arith.subf %39, %42 : vector<8x8xf32>
    %44 = math.exp %43 : vector<8x8xf32>
    %cst_24 = arith.constant dense<0.000000e+00> : vector<8xf32>
    %45 = vector.multi_reduction <add>, %44, %cst_24 [1] : vector<8x8xf32> to vector<8xf32>
    %46 = vector.shape_cast %45 : vector<8xf32> to vector<8x1xf32>
    %47 = tpu.reciprocal %46 {approx = true} : vector<8x1xf32> -> vector<8x1xf32>
    %48 = vector.broadcast %47 : vector<8x1xf32> to vector<8x8xf32>
    %49 = arith.mulf %44, %48 : vector<8x8xf32>
    %50 = arith.truncf %49 : vector<8x8xf32> to vector<8x8xbf16>
    %cst_25 = arith.constant dense<0.000000e+00> : vector<8x8xf32>
    %51 = tpu.matmul %50, %34, %cst_25 {dimension_numbers = #tpu.dot_dimension_numbers<[1], [0], [0], [1], [0, 0, 1, 1], [], []>} : vector<8x8xbf16>, vector<8x8xbf16>, vector<8x8xf32> -> vector<8x8xf32>
    %52 = arith.truncf %51 : vector<8x8xf32> to vector<8x8xbf16>
    %c0_26 = arith.constant 0 : index
    %c0_27 = arith.constant 0 : index
    %53 = vector.load %arg8[%c0_26, %c0_27] : memref<32x32xbf16, #tpu.memory_space<vmem>>, vector<8x32xbf16>
    %cst_28 = arith.constant dense<0.000000e+00> : vector<8x32xf32>
    %54 = tpu.matmul %52, %53, %cst_28 {dimension_numbers = #tpu.dot_dimension_numbers<[1], [0], [0], [1], [0, 0, 1, 1], [], []>} : vector<8x8xbf16>, vector<8x32xbf16>, vector<8x32xf32> -> vector<8x32xf32>
    %55 = arith.addf %28, %54 : vector<8x32xf32>
    %56 = vector.extract_strided_slice %9 {offsets = [0, 8], sizes = [8, 8], strides = [1, 1]} : vector<8x32xf32> to vector<8x8xf32>
    %57 = arith.truncf %56 : vector<8x8xf32> to vector<8x8xbf16>
    %58 = vector.extract_strided_slice %15 {offsets = [0, 8], sizes = [8, 8], strides = [1, 1]} : vector<8x64xf32> to vector<8x8xf32>
    %59 = arith.truncf %58 : vector<8x8xf32> to vector<8x8xbf16>
    %60 = vector.extract_strided_slice %15 {offsets = [0, 40], sizes = [8, 8], strides = [1, 1]} : vector<8x64xf32> to vector<8x8xf32>
    %61 = arith.truncf %60 : vector<8x8xf32> to vector<8x8xbf16>
    %cst_29 = arith.constant dense<0.000000e+00> : vector<8x8xf32>
    %62 = tpu.matmul %57, %59, %cst_29 {dimension_numbers = #tpu.dot_dimension_numbers<[1], [1], [0], [0], [0, 0, 1, 0], [], []>} : vector<8x8xbf16>, vector<8x8xbf16>, vector<8x8xf32> -> vector<8x8xf32>
    %cst_30 = arith.constant 0.353553385 : f32
    %63 = vector.broadcast %cst_30 : f32 to vector<8x8xf32>
    %64 = arith.mulf %62, %63 : vector<8x8xf32>
    %cst_31 = arith.constant -1.000000e+09 : f32
    %65 = vector.broadcast %cst_31 : f32 to vector<8x8xf32>
    %66 = arith.select %25, %65, %64 : vector<8x8xi1>, vector<8x8xf32>
    %cst_32 = arith.constant dense<0xFF800000> : vector<8xf32>
    %67 = vector.multi_reduction <maximumf>, %66, %cst_32 [1] : vector<8x8xf32> to vector<8xf32>
    %68 = vector.shape_cast %67 : vector<8xf32> to vector<8x1xf32>
    %69 = vector.broadcast %68 : vector<8x1xf32> to vector<8x8xf32>
    %70 = arith.subf %66, %69 : vector<8x8xf32>
    %71 = math.exp %70 : vector<8x8xf32>
    %cst_33 = arith.constant dense<0.000000e+00> : vector<8xf32>
    %72 = vector.multi_reduction <add>, %71, %cst_33 [1] : vector<8x8xf32> to vector<8xf32>
    %73 = vector.shape_cast %72 : vector<8xf32> to vector<8x1xf32>
    %74 = tpu.reciprocal %73 {approx = true} : vector<8x1xf32> -> vector<8x1xf32>
    %75 = vector.broadcast %74 : vector<8x1xf32> to vector<8x8xf32>
    %76 = arith.mulf %71, %75 : vector<8x8xf32>
    %77 = arith.truncf %76 : vector<8x8xf32> to vector<8x8xbf16>
    %cst_34 = arith.constant dense<0.000000e+00> : vector<8x8xf32>
    %78 = tpu.matmul %77, %61, %cst_34 {dimension_numbers = #tpu.dot_dimension_numbers<[1], [0], [0], [1], [0, 0, 1, 1], [], []>} : vector<8x8xbf16>, vector<8x8xbf16>, vector<8x8xf32> -> vector<8x8xf32>
    %79 = arith.truncf %78 : vector<8x8xf32> to vector<8x8xbf16>
    %c8 = arith.constant 8 : index
    %c0_35 = arith.constant 0 : index
    %80 = vector.load %arg8[%c8, %c0_35] : memref<32x32xbf16, #tpu.memory_space<vmem>>, vector<8x32xbf16>
    %cst_36 = arith.constant dense<0.000000e+00> : vector<8x32xf32>
    %81 = tpu.matmul %79, %80, %cst_36 {dimension_numbers = #tpu.dot_dimension_numbers<[1], [0], [0], [1], [0, 0, 1, 1], [], []>} : vector<8x8xbf16>, vector<8x32xbf16>, vector<8x32xf32> -> vector<8x32xf32>
    %82 = arith.addf %55, %81 : vector<8x32xf32>
    %83 = vector.extract_strided_slice %9 {offsets = [0, 16], sizes = [8, 8], strides = [1, 1]} : vector<8x32xf32> to vector<8x8xf32>
    %84 = arith.truncf %83 : vector<8x8xf32> to vector<8x8xbf16>
    %85 = vector.extract_strided_slice %15 {offsets = [0, 16], sizes = [8, 8], strides = [1, 1]} : vector<8x64xf32> to vector<8x8xf32>
    %86 = arith.truncf %85 : vector<8x8xf32> to vector<8x8xbf16>
    %87 = vector.extract_strided_slice %15 {offsets = [0, 48], sizes = [8, 8], strides = [1, 1]} : vector<8x64xf32> to vector<8x8xf32>
    %88 = arith.truncf %87 : vector<8x8xf32> to vector<8x8xbf16>
    %cst_37 = arith.constant dense<0.000000e+00> : vector<8x8xf32>
    %89 = tpu.matmul %84, %86, %cst_37 {dimension_numbers = #tpu.dot_dimension_numbers<[1], [1], [0], [0], [0, 0, 1, 0], [], []>} : vector<8x8xbf16>, vector<8x8xbf16>, vector<8x8xf32> -> vector<8x8xf32>
    %cst_38 = arith.constant 0.353553385 : f32
    %90 = vector.broadcast %cst_38 : f32 to vector<8x8xf32>
    %91 = arith.mulf %89, %90 : vector<8x8xf32>
    %cst_39 = arith.constant -1.000000e+09 : f32
    %92 = vector.broadcast %cst_39 : f32 to vector<8x8xf32>
    %93 = arith.select %25, %92, %91 : vector<8x8xi1>, vector<8x8xf32>
    %cst_40 = arith.constant dense<0xFF800000> : vector<8xf32>
    %94 = vector.multi_reduction <maximumf>, %93, %cst_40 [1] : vector<8x8xf32> to vector<8xf32>
    %95 = vector.shape_cast %94 : vector<8xf32> to vector<8x1xf32>
    %96 = vector.broadcast %95 : vector<8x1xf32> to vector<8x8xf32>
    %97 = arith.subf %93, %96 : vector<8x8xf32>
    %98 = math.exp %97 : vector<8x8xf32>
    %cst_41 = arith.constant dense<0.000000e+00> : vector<8xf32>
    %99 = vector.multi_reduction <add>, %98, %cst_41 [1] : vector<8x8xf32> to vector<8xf32>
    %100 = vector.shape_cast %99 : vector<8xf32> to vector<8x1xf32>
    %101 = tpu.reciprocal %100 {approx = true} : vector<8x1xf32> -> vector<8x1xf32>
    %102 = vector.broadcast %101 : vector<8x1xf32> to vector<8x8xf32>
    %103 = arith.mulf %98, %102 : vector<8x8xf32>
    %104 = arith.truncf %103 : vector<8x8xf32> to vector<8x8xbf16>
    %cst_42 = arith.constant dense<0.000000e+00> : vector<8x8xf32>
    %105 = tpu.matmul %104, %88, %cst_42 {dimension_numbers = #tpu.dot_dimension_numbers<[1], [0], [0], [1], [0, 0, 1, 1], [], []>} : vector<8x8xbf16>, vector<8x8xbf16>, vector<8x8xf32> -> vector<8x8xf32>
    %106 = arith.truncf %105 : vector<8x8xf32> to vector<8x8xbf16>
    %c16 = arith.constant 16 : index
    %c0_43 = arith.constant 0 : index
    %107 = vector.load %arg8[%c16, %c0_43] : memref<32x32xbf16, #tpu.memory_space<vmem>>, vector<8x32xbf16>
    %cst_44 = arith.constant dense<0.000000e+00> : vector<8x32xf32>
    %108 = tpu.matmul %106, %107, %cst_44 {dimension_numbers = #tpu.dot_dimension_numbers<[1], [0], [0], [1], [0, 0, 1, 1], [], []>} : vector<8x8xbf16>, vector<8x32xbf16>, vector<8x32xf32> -> vector<8x32xf32>
    %109 = arith.addf %82, %108 : vector<8x32xf32>
    %110 = vector.extract_strided_slice %9 {offsets = [0, 24], sizes = [8, 8], strides = [1, 1]} : vector<8x32xf32> to vector<8x8xf32>
    %111 = arith.truncf %110 : vector<8x8xf32> to vector<8x8xbf16>
    %112 = vector.extract_strided_slice %15 {offsets = [0, 24], sizes = [8, 8], strides = [1, 1]} : vector<8x64xf32> to vector<8x8xf32>
    %113 = arith.truncf %112 : vector<8x8xf32> to vector<8x8xbf16>
    %114 = vector.extract_strided_slice %15 {offsets = [0, 56], sizes = [8, 8], strides = [1, 1]} : vector<8x64xf32> to vector<8x8xf32>
    %115 = arith.truncf %114 : vector<8x8xf32> to vector<8x8xbf16>
    %cst_45 = arith.constant dense<0.000000e+00> : vector<8x8xf32>
    %116 = tpu.matmul %111, %113, %cst_45 {dimension_numbers = #tpu.dot_dimension_numbers<[1], [1], [0], [0], [0, 0, 1, 0], [], []>} : vector<8x8xbf16>, vector<8x8xbf16>, vector<8x8xf32> -> vector<8x8xf32>
    %cst_46 = arith.constant 0.353553385 : f32
    %117 = vector.broadcast %cst_46 : f32 to vector<8x8xf32>
    %118 = arith.mulf %116, %117 : vector<8x8xf32>
    %cst_47 = arith.constant -1.000000e+09 : f32
    %119 = vector.broadcast %cst_47 : f32 to vector<8x8xf32>
    %120 = arith.select %25, %119, %118 : vector<8x8xi1>, vector<8x8xf32>
    %cst_48 = arith.constant dense<0xFF800000> : vector<8xf32>
    %121 = vector.multi_reduction <maximumf>, %120, %cst_48 [1] : vector<8x8xf32> to vector<8xf32>
    %122 = vector.shape_cast %121 : vector<8xf32> to vector<8x1xf32>
    %123 = vector.broadcast %122 : vector<8x1xf32> to vector<8x8xf32>
    %124 = arith.subf %120, %123 : vector<8x8xf32>
    %125 = math.exp %124 : vector<8x8xf32>
    %cst_49 = arith.constant dense<0.000000e+00> : vector<8xf32>
    %126 = vector.multi_reduction <add>, %125, %cst_49 [1] : vector<8x8xf32> to vector<8xf32>
    %127 = vector.shape_cast %126 : vector<8xf32> to vector<8x1xf32>
    %128 = tpu.reciprocal %127 {approx = true} : vector<8x1xf32> -> vector<8x1xf32>
    %129 = vector.broadcast %128 : vector<8x1xf32> to vector<8x8xf32>
    %130 = arith.mulf %125, %129 : vector<8x8xf32>
    %131 = arith.truncf %130 : vector<8x8xf32> to vector<8x8xbf16>
    %cst_50 = arith.constant dense<0.000000e+00> : vector<8x8xf32>
    %132 = tpu.matmul %131, %115, %cst_50 {dimension_numbers = #tpu.dot_dimension_numbers<[1], [0], [0], [1], [0, 0, 1, 1], [], []>} : vector<8x8xbf16>, vector<8x8xbf16>, vector<8x8xf32> -> vector<8x8xf32>
    %133 = arith.truncf %132 : vector<8x8xf32> to vector<8x8xbf16>
    %c24 = arith.constant 24 : index
    %c0_51 = arith.constant 0 : index
    %134 = vector.load %arg8[%c24, %c0_51] : memref<32x32xbf16, #tpu.memory_space<vmem>>, vector<8x32xbf16>
    %cst_52 = arith.constant dense<0.000000e+00> : vector<8x32xf32>
    %135 = tpu.matmul %133, %134, %cst_52 {dimension_numbers = #tpu.dot_dimension_numbers<[1], [0], [0], [1], [0, 0, 1, 1], [], []>} : vector<8x8xbf16>, vector<8x32xbf16>, vector<8x32xf32> -> vector<8x32xf32>
    %136 = arith.addf %109, %135 : vector<8x32xf32>
    %cst_53 = arith.constant dense<0.000000e+00> : vector<8xf32>
    %137 = vector.multi_reduction <add>, %136, %cst_53 [1] : vector<8x32xf32> to vector<8xf32>
    %138 = vector.shape_cast %137 : vector<8xf32> to vector<8x1xf32>
    %cst_54 = arith.constant 3.200000e+01 : f32
    %139 = vector.broadcast %cst_54 : f32 to vector<8x1xf32>
    %140 = arith.divf %138, %139 : vector<8x1xf32>
    %141 = vector.broadcast %140 : vector<8x1xf32> to vector<8x32xf32>
    %142 = arith.subf %136, %141 : vector<8x32xf32>
    %143 = arith.mulf %142, %142 : vector<8x32xf32>
    %cst_55 = arith.constant dense<0.000000e+00> : vector<8xf32>
    %144 = vector.multi_reduction <add>, %143, %cst_55 [1] : vector<8x32xf32> to vector<8xf32>
    %145 = vector.shape_cast %144 : vector<8xf32> to vector<8x1xf32>
    %cst_56 = arith.constant 3.200000e+01 : f32
    %146 = vector.broadcast %cst_56 : f32 to vector<8x1xf32>
    %147 = arith.divf %145, %146 : vector<8x1xf32>
    %148 = vector.broadcast %140 : vector<8x1xf32> to vector<8x32xf32>
    %149 = arith.subf %136, %148 : vector<8x32xf32>
    %cst_57 = arith.constant 9.99999974E-6 : f32
    %150 = vector.broadcast %cst_57 : f32 to vector<8x1xf32>
    %151 = arith.addf %147, %150 : vector<8x1xf32>
    %152 = math.rsqrt %151 : vector<8x1xf32>
    %153 = vector.broadcast %152 : vector<8x1xf32> to vector<8x32xf32>
    %154 = arith.mulf %149, %153 : vector<8x32xf32>
    %c0_58 = arith.constant 0 : index
    %c0_59 = arith.constant 0 : index
    %155 = vector.load %arg10[%c0_58, %c0_59] : memref<1x32xf32, #tpu.memory_space<vmem>>, vector<1x32xf32>
    %156 = vector.broadcast %155 : vector<1x32xf32> to vector<8x32xf32>
    %157 = arith.mulf %154, %156 : vector<8x32xf32>
    %c0_60 = arith.constant 0 : index
    %c0_61 = arith.constant 0 : index
    %158 = vector.load %arg11[%c0_60, %c0_61] : memref<1x32xf32, #tpu.memory_space<vmem>>, vector<1x32xf32>
    %159 = vector.broadcast %158 : vector<1x32xf32> to vector<8x32xf32>
    %160 = arith.addf %157, %159 : vector<8x32xf32>
    %c0_62 = arith.constant 0 : index
    %c0_63 = arith.constant 0 : index
    %c0_64 = arith.constant 0 : index
    %161 = vector.load %arg12[%c0_62, %c0_63, %c0_64] : memref<1x8x32xf32, #tpu.memory_space<vmem>>, vector<1x8x32xf32>
    %162 = vector.shape_cast %161 : vector<1x8x32xf32> to vector<8x32xf32>
    %163 = vector.shape_cast %160 : vector<8x32xf32> to vector<1x8x32xf32>
    tpu.vector_store %arg12[%c0_62, %c0_63, %c0_64], %163 {strides = array<i32>} : memref<1x8x32xf32, #tpu.memory_space<vmem>>, vector<1x8x32xf32>,
    return
  }
  func.func @transform_0(%arg0: i32) -> (i32, i32, i32) {
    %c0_i32 = arith.constant 0 : i32
    %c0_i32_0 = arith.constant 0 : i32
    %c0_i32_1 = arith.constant 0 : i32
    return %arg0, %c0_i32, %c0_i32_0 : i32, i32, i32
  }
  func.func @transform_1(%arg0: i32) -> (i32, i32, i32) {
    %c0_i32 = arith.constant 0 : i32
    %c0_i32_0 = arith.constant 0 : i32
    %c0_i32_1 = arith.constant 0 : i32
    return %arg0, %c0_i32, %c0_i32_0 : i32, i32, i32
  }
  func.func @transform_2(%arg0: i32) -> (i32, i32, i32) {
    %c0_i32 = arith.constant 0 : i32
    %c0_i32_0 = arith.constant 0 : i32
    %c0_i32_1 = arith.constant 0 : i32
    return %arg0, %c0_i32, %c0_i32_0 : i32, i32, i32
  }
  func.func @transform_3(%arg0: i32) -> (i32, i32) {
    %c0_i32 = arith.constant 0 : i32
    %c0_i32_0 = arith.constant 0 : i32
    %c0_i32_1 = arith.constant 0 : i32
    return %c0_i32, %c0_i32_0 : i32, i32
  }
  func.func @transform_4(%arg0: i32) -> (i32, i32) {
    %c0_i32 = arith.constant 0 : i32
    %c0_i32_0 = arith.constant 0 : i32
    %c0_i32_1 = arith.constant 0 : i32
    return %c0_i32, %c0_i32_0 : i32, i32
  }
  func.func @transform_5(%arg0: i32) -> (i32, i32) {
    %c0_i32 = arith.constant 0 : i32
    %c0_i32_0 = arith.constant 0 : i32
    %c0_i32_1 = arith.constant 0 : i32
    return %c0_i32, %c0_i32_0 : i32, i32
  }
  func.func @transform_6(%arg0: i32) -> (i32, i32) {
    %c0_i32 = arith.constant 0 : i32
    %c0_i32_0 = arith.constant 0 : i32
    %c0_i32_1 = arith.constant 0 : i32
    return %c0_i32, %c0_i32_0 : i32, i32
  }
  func.func @transform_7(%arg0: i32) -> (i32, i32) {
    %c0_i32 = arith.constant 0 : i32
    %c0_i32_0 = arith.constant 0 : i32
    %c0_i32_1 = arith.constant 0 : i32
    return %c0_i32, %c0_i32_0 : i32, i32
  }
  func.func @transform_8(%arg0: i32) -> (i32, i32) {
    %c0_i32 = arith.constant 0 : i32
    %c0_i32_0 = arith.constant 0 : i32
    %c0_i32_1 = arith.constant 0 : i32
    return %c0_i32, %c0_i32_0 : i32, i32
  }
  func.func @transform_9(%arg0: i32) -> (i32, i32) {
    %c0_i32 = arith.constant 0 : i32
    %c0_i32_0 = arith.constant 0 : i32
    %c0_i32_1 = arith.constant 0 : i32
    return %c0_i32, %c0_i32_0 : i32, i32
  }
  func.func @transform_10(%arg0: i32) -> (i32, i32) {
    %c0_i32 = arith.constant 0 : i32
    %c0_i32_0 = arith.constant 0 : i32
    %c0_i32_1 = arith.constant 0 : i32
    return %c0_i32, %c0_i32_0 : i32, i32
  }
  func.func @transform_11(%arg0: i32) -> (i32, i32, i32) {
    %c0_i32 = arith.constant 0 : i32
    %c0_i32_0 = arith.constant 0 : i32
    %c0_i32_1 = arith.constant 0 : i32
    return %arg0, %c0_i32, %c0_i32_0 : i32, i32, i32
  }
}

</mosaic_0001>

<llo_original>
// kernel: tpu_custom_call.1
$region0: #{tpu_custom_call.1}
  #allocation0 [shape = 'u32[]', space=smem, size = 0x4, offset = 0x4, fixed_abs, tag = 'smem constant byte address 0x4 - core index']
  #allocation1 [shape = 'u32[72,128]{1,0:T(1,128)}', space=vmem, size = 0x9000, scoped, tag = 'internal scratch']
  %s0 = inlined_call_operand.hbm [shape: f32[2,8,32], index: 0, kind: input, shape index: {}]
  %s1 = inlined_call_operand.hbm [shape: f32[2,8,32], index: 1, kind: input, shape index: {}]
  %s2 = inlined_call_operand.hbm [shape: f32[2,1,8], index: 2, kind: input, shape index: {}]
  %s3 = inlined_call_operand.hbm [shape: bf16[32,32], index: 3, kind: input, shape index: {}]
  %s4 = inlined_call_operand.vmem [shape: f32[1,32], index: 4, kind: input, shape index: {}]
  %s5 = inlined_call_operand.hbm [shape: bf16[32,64], index: 5, kind: input, shape index: {}]
  %s6 = inlined_call_operand.vmem [shape: f32[1,64], index: 6, kind: input, shape index: {}]
  %s7 = inlined_call_operand.hbm [shape: bf16[32,32], index: 7, kind: input, shape index: {}]
  %s8 = inlined_call_operand.vmem [shape: f32[1,32], index: 8, kind: input, shape index: {}]
  %s9 = inlined_call_operand.vmem [shape: f32[1,32], index: 9, kind: input, shape index: {}]
  %s10 = inlined_call_operand.vmem [shape: f32[1,32], index: 10, kind: input, shape index: {}]
  %s11 = inlined_call_operand.hbm [shape: f32[2,8,32], index: 11, kind: output, shape index: {}]
  %s12 = sld [smem:[#allocation0]]
  $region101: #{tpu_custom_call.1} parent=0
    _
  %s14 = ssub.s32 1, %s12
  %s15 = scalar_select 0, %s14, %s12
  $region1: #{tpu_custom_call.1} parent=0
    #allocation2 [shape = 'u8[8192]{0}', space=vmem, size = 0x2000, scoped, tag = 'input window, operand 0']
    #allocation3 [shape = 's32[2]{0}', space=sflag, size = 0x8, scoped, tag = 'scoped memory for tpu_custom_call.1']
    #allocation4 [shape = 's32[2]{0}', space=sflag, size = 0x8, scoped, tag = 'scoped memory for tpu_custom_call.1']
    #allocation5 [shape = 'u8[8192]{0}', space=vmem, size = 0x2000, scoped, tag = 'input window, operand 1']
    #allocation6 [shape = 's32[2]{0}', space=sflag, size = 0x8, scoped, tag = 'scoped memory for tpu_custom_call.1']
    #allocation7 [shape = 'u8[1024]{0}', space=vmem, size = 0x400, scoped, tag = 'input window, operand 2']
    #allocation8 [shape = 'u8[8192]{0}', space=vmem, size = 0x2000, scoped, tag = 'input window, operand 3, single buffered']
    #allocation9 [shape = 's32[1]{0}', space=sflag, size = 0x4, scoped, tag = 'scoped memory for tpu_custom_call.1']
    #allocation10 [shape = 'u8[8192]{0}', space=vmem, size = 0x2000, scoped, tag = 'input window, operand 5, single buffered']
    #allocation11 [shape = 'u8[8192]{0}', space=vmem, size = 0x2000, scoped, tag = 'input window, operand 7, single buffered']
    #allocation12 [shape = 's32[1]{0}', space=sflag, size = 0x4, scoped, tag = 'scoped memory for tpu_custom_call.1']
    #allocation13 [shape = 'u8[8192]{0}', space=vmem, size = 0x2000, scoped, tag = 'output window, operand 0']
    %16 = vsyncpa [#allocation3], 0
    %s17 = scalar_lea.sflag [#allocation3], 1
    %18 = vsyncpa %s17, 0
    %19 = vsyncpa [#allocation6], 0
    %s20 = scalar_lea.sflag [#allocation6], 1
    %21 = vsyncpa %s20, 0
    %22 = vsyncpa [#allocation9], 0
    %23 = vsyncpa [#allocation12], 0
    %24 = vsyncpa [#allocation4], 0
    %s25 = scalar_lea.sflag [#allocation4], 1
    %26 = vsyncpa %s25, 0
    loop: start=0, step=1, limit=4
    $region2: #{tpu_custom_call.1} parent=1 // loop_pre_header
      _
    $region3: #{tpu_custom_call.1} parent=1 // loop_header
      %s28 = sphi 0, %s32
      %p29 = scmp.ge.s32.totalorder %s28, 4
      %s38 = sphi 0, %s40
      %s41 = sphi 0, %s38
      %s42 = sphi 0, %s41
      %s58 = sphi 0, %s42
      %s64 = sphi 0, %s66
      %s67 = sphi 0, %s64
      %s68 = sphi 0, %s67
      %s84 = sphi 0, %s68
      %s90 = sphi 0, %s92
      %s93 = sphi 0, %s90
      %s94 = sphi 0, %s93
      %s110 = sphi 0, %s94
      %s114 = sphi 0, %s114
      %s116 = sphi 0, %s114
      %s117 = sphi 0, %s116
      %s131 = sphi 0, %s117
      %s135 = sphi 0, %s135
      %s137 = sphi 0, %s135
      %s138 = sphi 0, %s137
      %s152 = sphi 0, %s138
      %s156 = sphi 0, %s156
      %s158 = sphi 0, %s156
      %s159 = sphi 0, %s158
      %s173 = sphi 0, %s159
      %s177 = sphi 0, %s177
      %s179 = sphi 0, %s177
      %s180 = sphi 0, %s179
      %s194 = sphi 0, %s180
      %s198 = sphi 0, %s198
      %s200 = sphi 0, %s198
      %s201 = sphi 0, %s200
      %s215 = sphi 0, %s201
      %s219 = sphi 0, %s219
      %s221 = sphi 0, %s219
      %s222 = sphi 0, %s221
      %s236 = sphi 0, %s222
      %s240 = sphi 0, %s240
      %s242 = sphi 0, %s240
      %s243 = sphi 0, %s242
      %s257 = sphi 0, %s243
      %s261 = sphi 0, %s261
      %s263 = sphi 0, %s261
      %s264 = sphi 0, %s263
      %s278 = sphi 0, %s264
      %s284 = sphi 0, %s286
      %s287 = sphi 0, %s284
      %s288 = sphi 0, %s287
      %s304 = sphi 0, %s288
    $region4: #{tpu_custom_call.1} parent=1 // loop_header_branch
      %31 = sbr.rel (%p29) target = $region8
    $region5: #{tpu_custom_call.1} parent=1 // loop_body
      %s33 = ssub.s32 %s28, 1
      %s34 = ssub.s32 %s28, 2
      %s35 = sadd.s32 %s28, 1
      %s36 = ssub.s32 %s28, %s35
      %p37 = scmp.eq.s32.totalorder %s36, 0
      %s39 = sadd.s32 %s38, 1
      %s40 = scalar_select %p37, %s38, %s39
      %p43 = pneg %p37
      %p44 = scmp.eq.s32.totalorder %s28, 1
      %p45 = por %p43, %p44
      %p46 = scmp.ne.s32.totalorder %s38, %s41
      %p47 = scmp.eq.s32.totalorder %s28, 0
      %p48 = por %p46, %p47
      %p49 = scmp.ne.s32.totalorder %s38, %s41
      %p50 = scmp.eq.s32.totalorder %s33, 1
      %p51 = por %p49, %p50
      %p52 = scmp.ne.s32.totalorder %s41, %s42
      %p53 = scmp.eq.s32.totalorder %s33, 0
      %p54 = por %p52, %p53
      %p55 = scmp.ne.s32.totalorder %s41, %s42
      %p56 = scmp.eq.s32.totalorder %s34, 1
      %p57 = por %p55, %p56
      %p59 = scmp.ne.s32.totalorder %s42, %s58
      %p60 = scmp.eq.s32.totalorder %s34, 0
      %p61 = por %p59, %p60
      %s62 = ssub.s32 %s28, %s35
      %p63 = scmp.eq.s32.totalorder %s62, 0
      %s65 = sadd.s32 %s64, 1
      %s66 = scalar_select %p63, %s64, %s65
      %p69 = pneg %p63
      %p70 = scmp.eq.s32.totalorder %s28, 1
      %p71 = por %p69, %p70
      %p72 = scmp.ne.s32.totalorder %s64, %s67
      %p73 = scmp.eq.s32.totalorder %s28, 0
      %p74 = por %p72, %p73
      %p75 = scmp.ne.s32.totalorder %s64, %s67
      %p76 = scmp.eq.s32.totalorder %s33, 1
      %p77 = por %p75, %p76
      %p78 = scmp.ne.s32.totalorder %s67, %s68
      %p79 = scmp.eq.s32.totalorder %s33, 0
      %p80 = por %p78, %p79
      %p81 = scmp.ne.s32.totalorder %s67, %s68
      %p82 = scmp.eq.s32.totalorder %s34, 1
      %p83 = por %p81, %p82
      %p85 = scmp.ne.s32.totalorder %s68, %s84
      %p86 = scmp.eq.s32.totalorder %s34, 0
      %p87 = por %p85, %p86
      %s88 = ssub.s32 %s28, %s35
      %p89 = scmp.eq.s32.totalorder %s88, 0
      %s91 = sadd.s32 %s90, 1
      %s92 = scalar_select %p89, %s90, %s91
      %p95 = pneg %p89
      %p96 = scmp.eq.s32.totalorder %s28, 1
      %p97 = por %p95, %p96
      %p98 = scmp.ne.s32.totalorder %s90, %s93
      %p99 = scmp.eq.s32.totalorder %s28, 0
      %p100 = por %p98, %p99
      %p101 = scmp.ne.s32.totalorder %s90, %s93
      %p102 = scmp.eq.s32.totalorder %s33, 1
      %p103 = por %p101, %p102
      %p104 = scmp.ne.s32.totalorder %s93, %s94
      %p105 = scmp.eq.s32.totalorder %s33, 0
      %p106 = por %p104, %p105
      %p107 = scmp.ne.s32.totalorder %s93, %s94
      %p108 = scmp.eq.s32.totalorder %s34, 1
      %p109 = por %p107, %p108
      %p111 = scmp.ne.s32.totalorder %s94, %s110
      %p112 = scmp.eq.s32.totalorder %s34, 0
      %p113 = por %p111, %p112
      %s115 = sadd.s32 %s114, 1
      %p118 = scmp.eq.s32.totalorder %s28, 1
      %p119 = scmp.ne.s32.totalorder %s114, %s116
      %p120 = scmp.eq.s32.totalorder %s28, 0
      %p121 = por %p119, %p120
      %p122 = scmp.ne.s32.totalorder %s114, %s116
      %p123 = scmp.eq.s32.totalorder %s33, 1
      %p124 = por %p122, %p123
      %p125 = scmp.ne.s32.totalorder %s116, %s117
      %p126 = scmp.eq.s32.totalorder %s33, 0
      %p127 = por %p125, %p126
      %p128 = scmp.ne.s32.totalorder %s116, %s117
      %p129 = scmp.eq.s32.totalorder %s34, 1
      %p130 = por %p128, %p129
      %p132 = scmp.ne.s32.totalorder %s117, %s131
      %p133 = scmp.eq.s32.totalorder %s34, 0
      %p134 = por %p132, %p133
      %s136 = sadd.s32 %s135, 1
      %p139 = scmp.eq.s32.totalorder %s28, 1
      %p140 = scmp.ne.s32.totalorder %s135, %s137
      %p141 = scmp.eq.s32.totalorder %s28, 0
      %p142 = por %p140, %p141
      %p143 = scmp.ne.s32.totalorder %s135, %s137
      %p144 = scmp.eq.s32.totalorder %s33, 1
      %p145 = por %p143, %p144
      %p146 = scmp.ne.s32.totalorder %s137, %s138
      %p147 = scmp.eq.s32.totalorder %s33, 0
      %p148 = por %p146, %p147
      %p149 = scmp.ne.s32.totalorder %s137, %s138
      %p150 = scmp.eq.s32.totalorder %s34, 1
      %p151 = por %p149, %p150
      %p153 = scmp.ne.s32.totalorder %s138, %s152
      %p154 = scmp.eq.s32.totalorder %s34, 0
      %p155 = por %p153, %p154
      %s157 = sadd.s32 %s156, 1
      %p160 = scmp.eq.s32.totalorder %s28, 1
      %p161 = scmp.ne.s32.totalorder %s156, %s158
      %p162 = scmp.eq.s32.totalorder %s28, 0
      %p163 = por %p161, %p162
      %p164 = scmp.ne.s32.totalorder %s156, %s158
      %p165 = scmp.eq.s32.totalorder %s33, 1
      %p166 = por %p164, %p165
      %p167 = scmp.ne.s32.totalorder %s158, %s159
      %p168 = scmp.eq.s32.totalorder %s33, 0
      %p169 = por %p167, %p168
      %p170 = scmp.ne.s32.totalorder %s158, %s159
      %p171 = scmp.eq.s32.totalorder %s34, 1
      %p172 = por %p170, %p171
      %p174 = scmp.ne.s32.totalorder %s159, %s173
      %p175 = scmp.eq.s32.totalorder %s34, 0
      %p176 = por %p174, %p175
      %s178 = sadd.s32 %s177, 1
      %p181 = scmp.eq.s32.totalorder %s28, 1
      %p182 = scmp.ne.s32.totalorder %s177, %s179
      %p183 = scmp.eq.s32.totalorder %s28, 0
      %p184 = por %p182, %p183
      %p185 = scmp.ne.s32.totalorder %s177, %s179
      %p186 = scmp.eq.s32.totalorder %s33, 1
      %p187 = por %p185, %p186
      %p188 = scmp.ne.s32.totalorder %s179, %s180
      %p189 = scmp.eq.s32.totalorder %s33, 0
      %p190 = por %p188, %p189
      %p191 = scmp.ne.s32.totalorder %s179, %s180
      %p192 = scmp.eq.s32.totalorder %s34, 1
      %p193 = por %p191, %p192
      %p195 = scmp.ne.s32.totalorder %s180, %s194
      %p196 = scmp.eq.s32.totalorder %s34, 0
      %p197 = por %p195, %p196
      %s199 = sadd.s32 %s198, 1
      %p202 = scmp.eq.s32.totalorder %s28, 1
      %p203 = scmp.ne.s32.totalorder %s198, %s200
      %p204 = scmp.eq.s32.totalorder %s28, 0
      %p205 = por %p203, %p204
      %p206 = scmp.ne.s32.totalorder %s198, %s200
      %p207 = scmp.eq.s32.totalorder %s33, 1
      %p208 = por %p206, %p207
      %p209 = scmp.ne.s32.totalorder %s200, %s201
      %p210 = scmp.eq.s32.totalorder %s33, 0
      %p211 = por %p209, %p210
      %p212 = scmp.ne.s32.totalorder %s200, %s201
      %p213 = scmp.eq.s32.totalorder %s34, 1
      %p214 = por %p212, %p213
      %p216 = scmp.ne.s32.totalorder %s201, %s215
      %p217 = scmp.eq.s32.totalorder %s34, 0
      %p218 = por %p216, %p217
      %s220 = sadd.s32 %s219, 1
      %p223 = scmp.eq.s32.totalorder %s28, 1
      %p224 = scmp.ne.s32.totalorder %s219, %s221
      %p225 = scmp.eq.s32.totalorder %s28, 0
      %p226 = por %p224, %p225
      %p227 = scmp.ne.s32.totalorder %s219, %s221
      %p228 = scmp.eq.s32.totalorder %s33, 1
      %p229 = por %p227, %p228
      %p230 = scmp.ne.s32.totalorder %s221, %s222
      %p231 = scmp.eq.s32.totalorder %s33, 0
      %p232 = por %p230, %p231
      %p233 = scmp.ne.s32.totalorder %s221, %s222
      %p234 = scmp.eq.s32.totalorder %s34, 1
      %p235 = por %p233, %p234
      %p237 = scmp.ne.s32.totalorder %s222, %s236
      %p238 = scmp.eq.s32.totalorder %s34, 0
      %p239 = por %p237, %p238
      %s241 = sadd.s32 %s240, 1
      %p244 = scmp.eq.s32.totalorder %s28, 1
      %p245 = scmp.ne.s32.totalorder %s240, %s242
      %p246 = scmp.eq.s32.totalorder %s28, 0
      %p247 = por %p245, %p246
      %p248 = scmp.ne.s32.totalorder %s240, %s242
      %p249 = scmp.eq.s32.totalorder %s33, 1
      %p250 = por %p248, %p249
      %p251 = scmp.ne.s32.totalorder %s242, %s243
      %p252 = scmp.eq.s32.totalorder %s33, 0
      %p253 = por %p251, %p252
      %p254 = scmp.ne.s32.totalorder %s242, %s243
      %p255 = scmp.eq.s32.totalorder %s34, 1
      %p256 = por %p254, %p255
      %p258 = scmp.ne.s32.totalorder %s243, %s257
      %p259 = scmp.eq.s32.totalorder %s34, 0
      %p260 = por %p258, %p259
      %s262 = sadd.s32 %s261, 1
      %p265 = scmp.eq.s32.totalorder %s28, 1
      %p266 = scmp.ne.s32.totalorder %s261, %s263
      %p267 = scmp.eq.s32.totalorder %s28, 0
      %p268 = por %p266, %p267
      %p269 = scmp.ne.s32.totalorder %s261, %s263
      %p270 = scmp.eq.s32.totalorder %s33, 1
      %p271 = por %p269, %p270
      %p272 = scmp.ne.s32.totalorder %s263, %s264
      %p273 = scmp.eq.s32.totalorder %s33, 0
      %p274 = por %p272, %p273
      %p275 = scmp.ne.s32.totalorder %s263, %s264
      %p276 = scmp.eq.s32.totalorder %s34, 1
      %p277 = por %p275, %p276
      %p279 = scmp.ne.s32.totalorder %s264, %s278
      %p280 = scmp.eq.s32.totalorder %s34, 0
      %p281 = por %p279, %p280
      %s282 = ssub.s32 %s28, %s35
      %p283 = scmp.eq.s32.totalorder %s282, 0
      %s285 = sadd.s32 %s284, 1
      %s286 = scalar_select %p283, %s284, %s285
      %p289 = pneg %p283
      %p290 = scmp.eq.s32.totalorder %s28, 1
      %p291 = por %p289, %p290
      %p292 = scmp.ne.s32.totalorder %s284, %s287
      %p293 = scmp.eq.s32.totalorder %s28, 0
      %p294 = por %p292, %p293
      %p295 = scmp.ne.s32.totalorder %s284, %s287
      %p296 = scmp.eq.s32.totalorder %s33, 1
      %p297 = por %p295, %p296
      %p298 = scmp.ne.s32.totalorder %s287, %s288
      %p299 = scmp.eq.s32.totalorder %s33, 0
      %p300 = por %p298, %p299
      %p301 = scmp.ne.s32.totalorder %s287, %s288
      %p302 = scmp.eq.s32.totalorder %s34, 1
      %p303 = por %p301, %p302
      %p305 = scmp.ne.s32.totalorder %s288, %s304
      %p306 = scmp.eq.s32.totalorder %s34, 0
      %p307 = por %p305, %p306
      %p308 = scmp.le.s32.totalorder 1, %s28
      %p309 = scmp.lt.s32.totalorder %s28, 3
      %p310 = pnand %p308, %p309
      %p311 = pneg %p310
      // Predicated region
      $region9: #{tpu_custom_call.1} parent=5 // pred_check
        _
      $region10: #{tpu_custom_call.1} parent=5 // pred_check_branch
        %313 = sbr.rel (%p310) target = $region12
      $region11: #{tpu_custom_call.1} parent=5 // pred_region
        %s314 = ssub.s32 %s28, 1
        // Predicated region
        $region13: #{tpu_custom_call.1} parent=11 // pred_check
          %p315 = pneg %p127
        $region14: #{tpu_custom_call.1} parent=11 // pred_check_branch
          %317 = sbr.rel (%p315) target = $region16
        $region15: #{tpu_custom_call.1} parent=11 // pred_region
          %319 = vsyncadd [#allocation9], 0
          %s320 = sshll.u32 %s3, 4
          %s321 = int_to_ptr.hbm [resolvable:$true] %s320
          %s322 = sshll.u32 [#allocation8], 4
          %s323 = int_to_ptr.vmem [resolvable:$true] %s322
          %328 = dma.hbm_to_vmem [thread:$0]  %s321, 256, %s323, [#allocation9], 64, 64, 4
        $region16: #{tpu_custom_call.1} parent=11 // pred_fallthru
          _
        // Predicated region
        $region17: #{tpu_custom_call.1} parent=11 // pred_check
          %p329 = pneg %p148
        $region18: #{tpu_custom_call.1} parent=11 // pred_check_branch
          %331 = sbr.rel (%p329) target = $region20
        $region19: #{tpu_custom_call.1} parent=11 // pred_region
          _
        $region20: #{tpu_custom_call.1} parent=11 // pred_fallthru
          _
        // Predicated region
        $region21: #{tpu_custom_call.1} parent=11 // pred_check
          %p332 = pneg %p169
        $region22: #{tpu_custom_call.1} parent=11 // pred_check_branch
          %334 = sbr.rel (%p332) target = $region24
        $region23: #{tpu_custom_call.1} parent=11 // pred_region
          %336 = vsyncadd [#allocation9], 0
          %s337 = sshll.u32 %s5, 4
          %s338 = int_to_ptr.hbm [resolvable:$true] %s337
          %s339 = sshll.u32 [#allocation10], 4
          %s340 = int_to_ptr.vmem [resolvable:$true] %s339
          %345 = dma.hbm_to_vmem [thread:$0]  %s338, 256, %s340, [#allocation9], 64, 64, 4
        $region24: #{tpu_custom_call.1} parent=11 // pred_fallthru
          _
        // Predicated region
        $region25: #{tpu_custom_call.1} parent=11 // pred_check
          %p346 = pneg %p190
        $region26: #{tpu_custom_call.1} parent=11 // pred_check_branch
          %348 = sbr.rel (%p346) target = $region28
        $region27: #{tpu_custom_call.1} parent=11 // pred_region
          _
        $region28: #{tpu_custom_call.1} parent=11 // pred_fallthru
          _
        // Predicated region
        $region29: #{tpu_custom_call.1} parent=11 // pred_check
          %p349 = pneg %p211
        $region30: #{tpu_custom_call.1} parent=11 // pred_check_branch
          %351 = sbr.rel (%p349) target = $region32
        $region31: #{tpu_custom_call.1} parent=11 // pred_region
          %353 = vsyncadd [#allocation12], 0
          %s354 = sshll.u32 %s7, 4
          %s355 = int_to_ptr.hbm [resolvable:$true] %s354
          %s356 = sshll.u32 [#allocation11], 4
          %s357 = int_to_ptr.vmem [resolvable:$true] %s356
          %362 = dma.hbm_to_vmem [thread:$0]  %s355, 256, %s357, [#allocation12], 64, 64, 4
        $region32: #{tpu_custom_call.1} parent=11 // pred_fallthru
          _
        // Predicated region
        $region33: #{tpu_custom_call.1} parent=11 // pred_check
          %p363 = pneg %p232
        $region34: #{tpu_custom_call.1} parent=11 // pred_check_branch
          %365 = sbr.rel (%p363) target = $region36
        $region35: #{tpu_custom_call.1} parent=11 // pred_region
          _
        $region36: #{tpu_custom_call.1} parent=11 // pred_fallthru
          _
        // Predicated region
        $region37: #{tpu_custom_call.1} parent=11 // pred_check
          %p366 = pneg %p253
        $region38: #{tpu_custom_call.1} parent=11 // pred_check_branch
          %368 = sbr.rel (%p366) target = $region40
        $region39: #{tpu_custom_call.1} parent=11 // pred_region
          _
        $region40: #{tpu_custom_call.1} parent=11 // pred_fallthru
          _
        // Predicated region
        $region41: #{tpu_custom_call.1} parent=11 // pred_check
          %p369 = pneg %p274
        $region42: #{tpu_custom_call.1} parent=11 // pred_check_branch
          %371 = sbr.rel (%p369) target = $region44
        $region43: #{tpu_custom_call.1} parent=11 // pred_region
          _
        $region44: #{tpu_custom_call.1} parent=11 // pred_fallthru
          _
      $region12: #{tpu_custom_call.1} parent=5 // pred_fallthru
        _
      %p372 = scmp.lt.s32.totalorder %s28, 2
      // Predicated region
      $region45: #{tpu_custom_call.1} parent=5 // pred_check
        %p373 = pneg %p372
      $region46: #{tpu_custom_call.1} parent=5 // pred_check_branch
        %375 = sbr.rel (%p373) target = $region48
      $region47: #{tpu_custom_call.1} parent=5 // pred_region
        // Predicated region
        $region49: #{tpu_custom_call.1} parent=47 // pred_check
          %p376 = pneg %p48
        $region50: #{tpu_custom_call.1} parent=47 // pred_check_branch
          %378 = sbr.rel (%p376) target = $region52
        $region51: #{tpu_custom_call.1} parent=47 // pred_region
          %s379 = sand.u32 %s38, 1
          %s380 = scalar_lea.sflag [#allocation3], %s379
          %s381 = sand.u32 %s38, 1
          %s382 = smul.addr %s381, 8
          %s383 = scalar_lea.vmem [#allocation2], %s382
          %385 = vsyncadd %s380, 0
          %s386 = smul.addr %s28, 8
          %s387 = scalar_lea.hbm %s0, %s386
          %s389 = sshll.u32 %s387, 4
          %s390 = int_to_ptr.hbm [resolvable:$true] %s389
          %s391 = sshll.u32 %s383, 4
          %s392 = int_to_ptr.vmem [resolvable:$true] %s391
          %394 = dma.hbm_to_vmem [thread:$0]  %s390, 128, %s392, %s380
        $region52: #{tpu_custom_call.1} parent=47 // pred_fallthru
          _
        // Predicated region
        $region53: #{tpu_custom_call.1} parent=47 // pred_check
          %p395 = pneg %p74
        $region54: #{tpu_custom_call.1} parent=47 // pred_check_branch
          %397 = sbr.rel (%p395) target = $region56
        $region55: #{tpu_custom_call.1} parent=47 // pred_region
          %s398 = sand.u32 %s28, 1
          %s399 = scalar_lea.sflag [#allocation6], %s398
          %s400 = sand.u32 %s64, 1
          %s401 = smul.addr %s400, 8
          %s402 = scalar_lea.vmem [#allocation5], %s401
          %404 = vsyncadd %s399, 0
          %s405 = smul.addr %s28, 8
          %s406 = scalar_lea.hbm %s1, %s405
          %s408 = sshll.u32 %s406, 4
          %s409 = int_to_ptr.hbm [resolvable:$true] %s408
          %s410 = sshll.u32 %s402, 4
          %s411 = int_to_ptr.vmem [resolvable:$true] %s410
          %413 = dma.hbm_to_vmem [thread:$0]  %s409, 128, %s411, %s399
        $region56: #{tpu_custom_call.1} parent=47 // pred_fallthru
          _
        // Predicated region
        $region57: #{tpu_custom_call.1} parent=47 // pred_check
          %p414 = pneg %p100
        $region58: #{tpu_custom_call.1} parent=47 // pred_check_branch
          %416 = sbr.rel (%p414) target = $region60
        $region59: #{tpu_custom_call.1} parent=47 // pred_region
          %s417 = sand.u32 %s28, 1
          %s418 = scalar_lea.sflag [#allocation6], %s417
          %s419 = sand.u32 %s90, 1
          %s420 = scalar_lea.vmem [#allocation7], %s419
          %422 = vsyncadd %s418, 0
          %s423 = scalar_lea.hbm %s2, %s28
          %s425 = sshll.u32 %s423, 4
          %s426 = int_to_ptr.hbm [resolvable:$true] %s425
          %s427 = sshll.u32 %s420, 4
          %s428 = int_to_ptr.vmem [resolvable:$true] %s427
          %430 = dma.hbm_to_vmem [thread:$0]  %s426, 16, %s428, %s418
        $region60: #{tpu_custom_call.1} parent=47 // pred_fallthru
          _
      $region48: #{tpu_custom_call.1} parent=5 // pred_fallthru
        _
      %p431 = scmp.le.s32.totalorder 1, %s28
      %p432 = scmp.lt.s32.totalorder %s28, 3
      %p433 = pnand %p431, %p432
      %p434 = pneg %p433
      // Predicated region
      $region61: #{tpu_custom_call.1} parent=5 // pred_check
        _
      $region62: #{tpu_custom_call.1} parent=5 // pred_check_branch
        %436 = sbr.rel (%p433) target = $region64
      $region63: #{tpu_custom_call.1} parent=5 // pred_region
        %s437 = ssub.s32 %s28, 1
        %s438 = sand.u32 %s41, 1
        %s439 = scalar_lea.sflag [#allocation3], %s438
        %s440 = sand.u32 %s41, 1
        %s441 = smul.addr %s440, 8
        %s442 = scalar_lea.vmem [#allocation2], %s441
        // Predicated region
        $region65: #{tpu_custom_call.1} parent=63 // pred_check
          %p443 = pneg %p54
        $region66: #{tpu_custom_call.1} parent=63 // pred_check_branch
          %445 = sbr.rel (%p443) target = $region68
        $region67: #{tpu_custom_call.1} parent=63 // pred_region
          %447 = dma.done %s439, 128
        $region68: #{tpu_custom_call.1} parent=63 // pred_fallthru
          _
        %s448 = sand.u32 %s33, 1
        %s449 = scalar_lea.sflag [#allocation6], %s448
        %s450 = sand.u32 %s67, 1
        %s451 = smul.addr %s450, 8
        %s452 = scalar_lea.vmem [#allocation5], %s451
        // Predicated region
        $region69: #{tpu_custom_call.1} parent=63 // pred_check
          %p453 = pneg %p80
        $region70: #{tpu_custom_call.1} parent=63 // pred_check_branch
          %455 = sbr.rel (%p453) target = $region72
        $region71: #{tpu_custom_call.1} parent=63 // pred_region
          %457 = dma.done %s449, 128
        $region72: #{tpu_custom_call.1} parent=63 // pred_fallthru
          _
        %s458 = sand.u32 %s33, 1
        %s459 = scalar_lea.sflag [#allocation6], %s458
        %s460 = sand.u32 %s93, 1
        %s461 = scalar_lea.vmem [#allocation7], %s460
        // Predicated region
        $region73: #{tpu_custom_call.1} parent=63 // pred_check
          %p462 = pneg %p106
        $region74: #{tpu_custom_call.1} parent=63 // pred_check_branch
          %464 = sbr.rel (%p462) target = $region76
        $region75: #{tpu_custom_call.1} parent=63 // pred_region
          %466 = dma.done %s459, 16
        $region76: #{tpu_custom_call.1} parent=63 // pred_fallthru
          _
        // Predicated region
        $region77: #{tpu_custom_call.1} parent=63 // pred_check
          %p467 = pneg %p127
        $region78: #{tpu_custom_call.1} parent=63 // pred_check_branch
          %469 = sbr.rel (%p467) target = $region80
        $region79: #{tpu_custom_call.1} parent=63 // pred_region
          %471 = dma.done [#allocation9], 256
        $region80: #{tpu_custom_call.1} parent=63 // pred_fallthru
          _
        // Predicated region
        $region81: #{tpu_custom_call.1} parent=63 // pred_check
          %p472 = pneg %p169
        $region82: #{tpu_custom_call.1} parent=63 // pred_check_branch
          %474 = sbr.rel (%p472) target = $region84
        $region83: #{tpu_custom_call.1} parent=63 // pred_region
          %476 = dma.done [#allocation9], 256
        $region84: #{tpu_custom_call.1} parent=63 // pred_fallthru
          _
        // Predicated region
        $region85: #{tpu_custom_call.1} parent=63 // pred_check
          %p477 = pneg %p211
        $region86: #{tpu_custom_call.1} parent=63 // pred_check_branch
          %479 = sbr.rel (%p477) target = $region88
        $region87: #{tpu_custom_call.1} parent=63 // pred_region
          %481 = dma.done [#allocation12], 256
        $region88: #{tpu_custom_call.1} parent=63 // pred_fallthru
          _
        %s482 = sand.u32 %s41, 1
        %s483 = scalar_lea.sflag [#allocation3], %s482
        %s484 = sand.u32 %s41, 1
        %s485 = smul.addr %s484, 8
        %s486 = scalar_lea.vmem [#allocation2], %s485
        %p487 = pneg %p54
        %p488 = pneg %p51
        %s489 = sand.u32 %s33, 1
        %s490 = scalar_lea.sflag [#allocation6], %s489
        %s491 = sand.u32 %s67, 1
        %s492 = smul.addr %s491, 8
        %s493 = scalar_lea.vmem [#allocation5], %s492
        %p494 = pneg %p80
        %p495 = pneg %p77
        %s496 = sand.u32 %s33, 1
        %s497 = scalar_lea.sflag [#allocation6], %s496
        %s498 = sand.u32 %s93, 1
        %s499 = scalar_lea.vmem [#allocation7], %s498
        %p500 = pneg %p106
        %p501 = pneg %p103
        %p502 = pneg %p127
        %p503 = pneg %p124
        %p504 = pneg %p148
        %p505 = pneg %p145
        %p506 = pneg %p169
        %p507 = pneg %p166
        %p508 = pneg %p190
        %p509 = pneg %p187
        %p510 = pneg %p211
        %p511 = pneg %p208
        %p512 = pneg %p232
        %p513 = pneg %p229
        %p514 = pneg %p253
        %p515 = pneg %p250
        %p516 = pneg %p274
        %p517 = pneg %p271
        %p518 = pneg %p300
        %p519 = pneg %p297
        %s520 = sand.u32 %s287, 1
        %s521 = scalar_lea.sflag [#allocation4], %s520
        %s522 = sand.u32 %s287, 1
        %s523 = smul.addr %s522, 8
        %s524 = scalar_lea.vmem [#allocation13], %s523
        %v526 = vld [vmem:[%s442] sm:$0xff]
        %v527 = vld [vmem:[%s452] sm:$0xff]
        %v528 = vpack.c.bf16 %v526, %v526
        %v529 = vld [vmem:[#allocation8] sm:$0xf]
        %v530 = vld [vmem:[#allocation8 + $0x4] sm:$0xf]
        %v531 = vld [vmem:[#allocation8 + $0x8] sm:$0xf]
        %v532 = vld [vmem:[#allocation8 + $0xc] sm:$0xf]
        %v533 = vld [vmem:[%s4] sm:$0x1]
        %v535 = vperm.slane %v533, 0
        %v541 = vunpack.c.l.b16 %v529
        %v542 = vunpack.c.l.b16 %v530
        %v543 = vunpack.c.l.b16 %v531
        %v544 = vunpack.c.l.b16 %v532
        %v545 = vpack.c.b16 %v542, %v541
        %v546 = vpack.c.b16 %v544, %v543
        %vm549 = vcmask 261120
        %v551 = vsel %vm549, %v528, 0
        %553 = vmatpush.bf16.msra.mxu0 0
        %554 = vmatpush.bf16.msra.mxu0 0
        %555 = vmatpush.bf16.msra.mxu0 0
        %556 = vmatpush.bf16.msra.mxu0 0
        %557 = vmatpush.bf16.msra.mxu0 0
        %558 = vmatpush.bf16.msra.mxu0 0
        %559 = vmatpush.bf16.msra.mxu0 %v546
        %560 = vmatpush.bf16.msra.mxu0 %v545
        %561 = vmatmul.bf16.gmra.mxu0 %v551
        %v562 = vpop.f32.mrf.mxu0
        %v563 = vadd.f32 %v535, %v562
        %v564 = vpop.f32.mrf.mxu0
        %565 = vdwg.mxu0
        %v566 = vpack.c.bf16 %v527, %v527
        %v567 = vld [vmem:[#allocation10] sm:$0xf]
        %v568 = vld [vmem:[#allocation10 + $0x4] sm:$0xf]
        %v569 = vld [vmem:[#allocation10 + $0x8] sm:$0xf]
        %v570 = vld [vmem:[#allocation10 + $0xc] sm:$0xf]
        %v571 = vld [vmem:[%s6] sm:$0x1]
        %v573 = vperm.slane %v571, 0
        %v579 = vunpack.c.l.b16 %v567
        %v580 = vunpack.c.l.b16 %v568
        %v581 = vunpack.c.l.b16 %v569
        %v582 = vunpack.c.l.b16 %v570
        %v583 = vpack.c.b16 %v580, %v579
        %v584 = vpack.c.b16 %v582, %v581
        %v588 = vsel %vm549, %v566, 0
        %590 = vmatpush.bf16.msra.mxu0 0
        %591 = vmatpush.bf16.msra.mxu0 0
        %592 = vmatpush.bf16.msra.mxu0 0
        %593 = vmatpush.bf16.msra.mxu0 0
        %594 = vmatpush.bf16.msra.mxu0 0
        %595 = vmatpush.bf16.msra.mxu0 0
        %596 = vmatpush.bf16.msra.mxu0 %v584
        %597 = vmatpush.bf16.msra.mxu0 %v583
        %598 = vmatmul.bf16.gmra.mxu0 %v588
        %v599 = vpop.f32.mrf.mxu0
        %v600 = vadd.f32 %v573, %v599
        %v601 = vpop.f32.mrf.mxu0
        %602 = vdwg.mxu0
        %v603 = vld [vmem:[%s461] sm:$0x1]
        %vm604 = vcmp.gt.f32.partialorder %v603, 0.5
        %v605 = vsel %vm604, 1, 0
        %v606 = vperm.slane %v605, 0
        %vm607 = vcmp.eq.s32.totalorder %v606, 1
        %v608 = vlaneseq
        %v609 = vshrl.u32 %v608, 7
        %v610 = vlaneseq
        %v611 = vand.u32 %v610, 127
        %vm612 = vcmp.gt.s32.totalorder %v611, %v609
        %vm613 = vmor %vm607, %vm612
        %v614 = vld [vmem:[%s8] sm:$0x1]
        %v616 = vperm.slane %v614, 0
        %v618 = vadd.f32 %v616, %v526
        %v619 = vpack.c.bf16 %v563, %v563
        %v620 = vpack.c.bf16 %v600, %v600
        %vm621 = vcmask 64512
        %v623 = vsel %vm621, %v619, 0
        %v626 = vsel %vm621, %v620, 0
        %628 = vmatpush.bf16.xpose.msra.mxu0 0
        %629 = vmatpush.bf16.xpose.msra.mxu0 0
        %630 = vmatpush.bf16.xpose.msra.mxu0 0
        %631 = vmatpush.bf16.xpose.msra.mxu0 0
        %632 = vmatpush.bf16.xpose.msra.mxu0 0
        %633 = vmatpush.bf16.xpose.msra.mxu0 0
        %634 = vmatpush.bf16.xpose.msra.mxu0 0
        %635 = vmatpush.bf16.xpose.msra.mxu0 %v626
        %636 = vmatmul.bf16.gmra.mxu0 %v623
        %v637 = vpop.f32.mrf.mxu0
        %v638 = vadd.f32 0.0, %v637
        %v639 = vpop.f32.mrf.mxu0
        %640 = vdwg.mxu0
        %v641 = vmul.f32 %v638, 0.35355338
        %v642 = vsel %vm613, -1e+09, %v641
        %v643 = vsel %vm621, %v642, -inf
        %644 = vmax.xlane.f32.xlu0 %v643
        %v645 = vpop.xlane.xlu0 %644
        %v646 = vsub.f32 %v642, %v645
        %v647 = vmul.f32 %v646, 1.442695
        %v648 = vpow.pop %v647
        %v649 = vsel %vm621, %v648, 0.0
        %650 = vadd.xlane.f32.xlu0 %v649
        %v651 = vpop.xlane.xlu0 %650
        %v652 = vrcp.pop %v651
        %v653 = vmul.f32 %v648, %v652
        %v654 = vpack.c.bf16 %v653, %v653
        %656 = vrot.lane.b32.xlu0 %v620, 96
        %v657 = vpop.permute.xlu0 %656
        %v659 = vsel %vm621, %v654, 0
        %vm661 = vcmask 1043456
        %v663 = vsel %vm661, %v657, 0
        %665 = vmatpush.bf16.msra.mxu0 0
        %666 = vmatpush.bf16.msra.mxu0 0
        %667 = vmatpush.bf16.msra.mxu0 0
        %668 = vmatpush.bf16.msra.mxu0 0
        %669 = vmatpush.bf16.msra.mxu0 0
        %670 = vmatpush.bf16.msra.mxu0 0
        %671 = vmatpush.bf16.msra.mxu0 0
        %672 = vmatpush.bf16.msra.mxu0 %v663
        %673 = vmatmul.bf16.gmra.mxu0 %v659
        %v674 = vpop.f32.mrf.mxu0
        %v675 = vadd.f32 0.0, %v674
        %v676 = vpop.f32.mrf.mxu0
        %677 = vdwg.mxu0
        %v678 = vpack.c.bf16 %v675, %v675
        %v679 = vld [vmem:[#allocation11] sm:$0xf]
        %v681 = vsel %vm621, %v678, 0
        %v684 = vsel %vm661, %v679, 0
        %686 = vmatpush.bf16.msra.mxu0 0
        %687 = vmatpush.bf16.msra.mxu0 0
        %688 = vmatpush.bf16.msra.mxu0 0
        %689 = vmatpush.bf16.msra.mxu0 0
        %690 = vmatpush.bf16.msra.mxu0 0
        %691 = vmatpush.bf16.msra.mxu0 0
        %692 = vmatpush.bf16.msra.mxu0 0
        %693 = vmatpush.bf16.msra.mxu0 %v684
        %694 = vmatmul.bf16.gmra.mxu0 %v681
        %v695 = vpop.f32.mrf.mxu0
        %v696 = vadd.f32 0.0, %v695
        %v697 = vpop.f32.mrf.mxu0
        %698 = vdwg.mxu0
        %v699 = vadd.f32 %v618, %v696
        %701 = vrot.lane.b32.xlu0 %v619, 120
        %v702 = vpop.permute.xlu0 %701
        %703 = vrot.lane.b32.xlu0 %v620, 120
        %v704 = vpop.permute.xlu0 %703
        %v706 = vsel %vm621, %v702, 0
        %v709 = vsel %vm621, %v704, 0
        %711 = vmatpush.bf16.xpose.msra.mxu0 0
        %712 = vmatpush.bf16.xpose.msra.mxu0 0
        %713 = vmatpush.bf16.xpose.msra.mxu0 0
        %714 = vmatpush.bf16.xpose.msra.mxu0 0
        %715 = vmatpush.bf16.xpose.msra.mxu0 0
        %716 = vmatpush.bf16.xpose.msra.mxu0 0
        %717 = vmatpush.bf16.xpose.msra.mxu0 0
        %718 = vmatpush.bf16.xpose.msra.mxu0 %v709
        %719 = vmatmul.bf16.gmra.mxu0 %v706
        %v720 = vpop.f32.mrf.mxu0
        %v721 = vadd.f32 0.0, %v720
        %v722 = vpop.f32.mrf.mxu0
        %723 = vdwg.mxu0
        %v724 = vmul.f32 %v721, 0.35355338
        %v725 = vsel %vm613, -1e+09, %v724
        %v726 = vsel %vm621, %v725, -inf
        %727 = vmax.xlane.f32.xlu0 %v726
        %v728 = vpop.xlane.xlu0 %727
        %v729 = vsub.f32 %v725, %v728
        %v730 = vmul.f32 %v729, 1.442695
        %v731 = vpow.pop %v730
        %v732 = vsel %vm621, %v731, 0.0
        %733 = vadd.xlane.f32.xlu0 %v732
        %v734 = vpop.xlane.xlu0 %733
        %v735 = vrcp.pop %v734
        %v736 = vmul.f32 %v731, %v735
        %v737 = vpack.c.bf16 %v736, %v736
        %738 = vrot.lane.b32.xlu0 %v620, 88
        %v739 = vpop.permute.xlu0 %738
        %v741 = vsel %vm621, %v737, 0
        %v744 = vsel %vm661, %v739, 0
        %746 = vmatpush.bf16.msra.mxu0 0
        %747 = vmatpush.bf16.msra.mxu0 0
        %748 = vmatpush.bf16.msra.mxu0 0
        %749 = vmatpush.bf16.msra.mxu0 0
        %750 = vmatpush.bf16.msra.mxu0 0
        %751 = vmatpush.bf16.msra.mxu0 0
        %752 = vmatpush.bf16.msra.mxu0 0
        %753 = vmatpush.bf16.msra.mxu0 %v744
        %754 = vmatmul.bf16.gmra.mxu0 %v741
        %v755 = vpop.f32.mrf.mxu0
        %v756 = vadd.f32 0.0, %v755
        %v757 = vpop.f32.mrf.mxu0
        %758 = vdwg.mxu0
        %v759 = vpack.c.bf16 %v756, %v756
        %v760 = vld [vmem:[#allocation11 + $0x4] sm:$0xf]
        %v762 = vsel %vm621, %v759, 0
        %v765 = vsel %vm661, %v760, 0
        %767 = vmatpush.bf16.msra.mxu0 0
        %768 = vmatpush.bf16.msra.mxu0 0
        %769 = vmatpush.bf16.msra.mxu0 0
        %770 = vmatpush.bf16.msra.mxu0 0
        %771 = vmatpush.bf16.msra.mxu0 0
        %772 = vmatpush.bf16.msra.mxu0 0
        %773 = vmatpush.bf16.msra.mxu0 0
        %774 = vmatpush.bf16.msra.mxu0 %v765
        %775 = vmatmul.bf16.gmra.mxu0 %v762
        %v776 = vpop.f32.mrf.mxu0
        %v777 = vadd.f32 0.0, %v776
        %v778 = vpop.f32.mrf.mxu0
        %779 = vdwg.mxu0
        %v780 = vadd.f32 %v699, %v777
        %781 = vrot.lane.b32.xlu0 %v619, 112
        %v782 = vpop.permute.xlu0 %781
        %783 = vrot.lane.b32.xlu0 %v620, 112
        %v784 = vpop.permute.xlu0 %783
        %v786 = vsel %vm621, %v782, 0
        %v789 = vsel %vm621, %v784, 0
        %791 = vmatpush.bf16.xpose.msra.mxu0 0
        %792 = vmatpush.bf16.xpose.msra.mxu0 0
        %793 = vmatpush.bf16.xpose.msra.mxu0 0
        %794 = vmatpush.bf16.xpose.msra.mxu0 0
        %795 = vmatpush.bf16.xpose.msra.mxu0 0
        %796 = vmatpush.bf16.xpose.msra.mxu0 0
        %797 = vmatpush.bf16.xpose.msra.mxu0 0
        %798 = vmatpush.bf16.xpose.msra.mxu0 %v789
        %799 = vmatmul.bf16.gmra.mxu0 %v786
        %v800 = vpop.f32.mrf.mxu0
        %v801 = vadd.f32 0.0, %v800
        %v802 = vpop.f32.mrf.mxu0
        %803 = vdwg.mxu0
        %v804 = vmul.f32 %v801, 0.35355338
        %v805 = vsel %vm613, -1e+09, %v804
        %v806 = vsel %vm621, %v805, -inf
        %807 = vmax.xlane.f32.xlu0 %v806
        %v808 = vpop.xlane.xlu0 %807
        %v809 = vsub.f32 %v805, %v808
        %v810 = vmul.f32 %v809, 1.442695
        %v811 = vpow.pop %v810
        %v812 = vsel %vm621, %v811, 0.0
        %813 = vadd.xlane.f32.xlu0 %v812
        %v814 = vpop.xlane.xlu0 %813
        %v815 = vrcp.pop %v814
        %v816 = vmul.f32 %v811, %v815
        %v817 = vpack.c.bf16 %v816, %v816
        %818 = vrot.lane.b32.xlu0 %v620, 80
        %v819 = vpop.permute.xlu0 %818
        %v821 = vsel %vm621, %v817, 0
        %v824 = vsel %vm661, %v819, 0
        %826 = vmatpush.bf16.msra.mxu0 0
        %827 = vmatpush.bf16.msra.mxu0 0
        %828 = vmatpush.bf16.msra.mxu0 0
        %829 = vmatpush.bf16.msra.mxu0 0
        %830 = vmatpush.bf16.msra.mxu0 0
        %831 = vmatpush.bf16.msra.mxu0 0
        %832 = vmatpush.bf16.msra.mxu0 0
        %833 = vmatpush.bf16.msra.mxu0 %v824
        %834 = vmatmul.bf16.gmra.mxu0 %v821
        %v835 = vpop.f32.mrf.mxu0
        %v836 = vadd.f32 0.0, %v835
        %v837 = vpop.f32.mrf.mxu0
        %838 = vdwg.mxu0
        %v839 = vpack.c.bf16 %v836, %v836
        %v840 = vld [vmem:[#allocation11 + $0x8] sm:$0xf]
        %v842 = vsel %vm621, %v839, 0
        %v845 = vsel %vm661, %v840, 0
        %847 = vmatpush.bf16.msra.mxu0 0
        %848 = vmatpush.bf16.msra.mxu0 0
        %849 = vmatpush.bf16.msra.mxu0 0
        %850 = vmatpush.bf16.msra.mxu0 0
        %851 = vmatpush.bf16.msra.mxu0 0
        %852 = vmatpush.bf16.msra.mxu0 0
        %853 = vmatpush.bf16.msra.mxu0 0
        %854 = vmatpush.bf16.msra.mxu0 %v845
        %855 = vmatmul.bf16.gmra.mxu0 %v842
        %v856 = vpop.f32.mrf.mxu0
        %v857 = vadd.f32 0.0, %v856
        %v858 = vpop.f32.mrf.mxu0
        %859 = vdwg.mxu0
        %v860 = vadd.f32 %v780, %v857
        %861 = vrot.lane.b32.xlu0 %v619, 104
        %v862 = vpop.permute.xlu0 %861
        %863 = vrot.lane.b32.xlu0 %v620, 104
        %v864 = vpop.permute.xlu0 %863
        %v866 = vsel %vm621, %v862, 0
        %v869 = vsel %vm621, %v864, 0
        %871 = vmatpush.bf16.xpose.msra.mxu0 0
        %872 = vmatpush.bf16.xpose.msra.mxu0 0
        %873 = vmatpush.bf16.xpose.msra.mxu0 0
        %874 = vmatpush.bf16.xpose.msra.mxu0 0
        %875 = vmatpush.bf16.xpose.msra.mxu0 0
        %876 = vmatpush.bf16.xpose.msra.mxu0 0
        %877 = vmatpush.bf16.xpose.msra.mxu0 0
        %878 = vmatpush.bf16.xpose.msra.mxu0 %v869
        %879 = vmatmul.bf16.gmra.mxu0 %v866
        %v880 = vpop.f32.mrf.mxu0
        %v881 = vadd.f32 0.0, %v880
        %v882 = vpop.f32.mrf.mxu0
        %883 = vdwg.mxu0
        %v884 = vmul.f32 %v881, 0.35355338
        %v885 = vsel %vm613, -1e+09, %v884
        %v886 = vsel %vm621, %v885, -inf
        %887 = vmax.xlane.f32.xlu0 %v886
        %v888 = vpop.xlane.xlu0 %887
        %v889 = vsub.f32 %v885, %v888
        %v890 = vmul.f32 %v889, 1.442695
        %v891 = vpow.pop %v890
        %v892 = vsel %vm621, %v891, 0.0
        %893 = vadd.xlane.f32.xlu0 %v892
        %v894 = vpop.xlane.xlu0 %893
        %v895 = vrcp.pop %v894
        %v896 = vmul.f32 %v891, %v895
        %v897 = vpack.c.bf16 %v896, %v896
        %898 = vrot.lane.b32.xlu0 %v620, 72
        %v899 = vpop.permute.xlu0 %898
        %v901 = vsel %vm621, %v897, 0
        %v904 = vsel %vm661, %v899, 0
        %906 = vmatpush.bf16.msra.mxu0 0
        %907 = vmatpush.bf16.msra.mxu0 0
        %908 = vmatpush.bf16.msra.mxu0 0
        %909 = vmatpush.bf16.msra.mxu0 0
        %910 = vmatpush.bf16.msra.mxu0 0
        %911 = vmatpush.bf16.msra.mxu0 0
        %912 = vmatpush.bf16.msra.mxu0 0
        %913 = vmatpush.bf16.msra.mxu0 %v904
        %914 = vmatmul.bf16.gmra.mxu0 %v901
        %v915 = vpop.f32.mrf.mxu0
        %v916 = vadd.f32 0.0, %v915
        %v917 = vpop.f32.mrf.mxu0
        %918 = vdwg.mxu0
        %v919 = vpack.c.bf16 %v916, %v916
        %v920 = vld [vmem:[#allocation11 + $0xc] sm:$0xf]
        %v922 = vsel %vm621, %v919, 0
        %v925 = vsel %vm661, %v920, 0
        %927 = vmatpush.bf16.msra.mxu0 0
        %928 = vmatpush.bf16.msra.mxu0 0
        %929 = vmatpush.bf16.msra.mxu0 0
        %930 = vmatpush.bf16.msra.mxu0 0
        %931 = vmatpush.bf16.msra.mxu0 0
        %932 = vmatpush.bf16.msra.mxu0 0
        %933 = vmatpush.bf16.msra.mxu0 0
        %934 = vmatpush.bf16.msra.mxu0 %v925
        %935 = vmatmul.bf16.gmra.mxu0 %v922
        %v936 = vpop.f32.mrf.mxu0
        %v937 = vadd.f32 0.0, %v936
        %v938 = vpop.f32.mrf.mxu0
        %939 = vdwg.mxu0
        %v940 = vadd.f32 %v860, %v937
        %v941 = vsel %vm549, %v940, 0.0
        %942 = vadd.xlane.f32.xlu0 %v941
        %v943 = vpop.xlane.xlu0 %942
        %v944 = vrcp.pop 32.0
        %v945 = vmul.f32 32.0, %v944
        %v946 = vsub.f32 1.0, %v945
        %v947 = vmul.f32 %v944, %v946
        %v948 = vadd.f32 %v944, %v947
        %vm949 = vweird.f32 %v944
        %v950 = vsel %vm949, %v944, %v948
        %v951 = vmul.f32 %v943, %v950
        %v952 = vsub.f32 %v940, %v951
        %v953 = vmul.f32 %v952, %v952
        %v954 = vsel %vm549, %v953, 0.0
        %955 = vadd.xlane.f32.xlu0 %v954
        %v956 = vpop.xlane.xlu0 %955
        %v957 = vmul.f32 %v956, %v950
        %v958 = vadd.f32 %v957, 1e-05
        %v959 = vrsqrt.pop %v958
        %v960 = vmul.f32 %v959, %v958
        %v961 = vmul.f32 %v960, %v959
        %v962 = vmul.f32 0.5, %v961
        %v963 = vsub.f32 1.5, %v962
        %v964 = vmul.f32 %v959, %v963
        %vm965 = vweird.f32 %v958
        %vm966 = vweird.f32 %v959
        %vm967 = vmor %vm965, %vm966
        %v968 = vsel %vm967, %v959, %v964
        %v969 = vmul.f32 %v952, %v968
        %v970 = vld [vmem:[%s9] sm:$0x1]
        %v972 = vperm.slane %v970, 0
        %v974 = vmul.f32 %v969, %v972
        %v975 = vld [vmem:[%s10] sm:$0x1]
        %v977 = vperm.slane %v975, 0
        %v979 = vadd.f32 %v974, %v977
        %980 = vst.msk [vmem:[%s524] sm:$0xff] %vm549, %v979
        %s981 = sand.u32 %s287, 1
        %s982 = scalar_lea.sflag [#allocation4], %s981
        %s983 = sand.u32 %s287, 1
        %s984 = smul.addr %s983, 8
        %s985 = scalar_lea.vmem [#allocation13], %s984
        // Predicated region
        $region89: #{tpu_custom_call.1} parent=63 // pred_check
          %p986 = pneg %p297
        $region90: #{tpu_custom_call.1} parent=63 // pred_check_branch
          %988 = sbr.rel (%p986) target = $region92
        $region91: #{tpu_custom_call.1} parent=63 // pred_region
          %990 = vsyncadd %s982, 0
          %s991 = smul.addr %s33, 8
          %s992 = scalar_lea.hbm %s11, %s991
          %s994 = sshll.u32 %s985, 4
          %s995 = int_to_ptr.vmem [resolvable:$true] %s994
          %s996 = sshll.u32 %s992, 4
          %s997 = int_to_ptr.hbm [resolvable:$true] %s996
          %999 = dma.vmem_to_hbm [thread:$0]  %s995, 128, %s997, %s982
        $region92: #{tpu_custom_call.1} parent=63 // pred_fallthru
          _
      $region64: #{tpu_custom_call.1} parent=5 // pred_fallthru
        _
      %p1000 = scmp.le.s32.totalorder 2, %s28
      // Predicated region
      $region93: #{tpu_custom_call.1} parent=5 // pred_check
        %p1001 = pneg %p1000
      $region94: #{tpu_custom_call.1} parent=5 // pred_check_branch
        %1003 = sbr.rel (%p1001) target = $region96
      $region95: #{tpu_custom_call.1} parent=5 // pred_region
        %s1004 = ssub.s32 %s28, 2
        // Predicated region
        $region97: #{tpu_custom_call.1} parent=95 // pred_check
          %p1005 = pneg %p303
        $region98: #{tpu_custom_call.1} parent=95 // pred_check_branch
          %1007 = sbr.rel (%p1005) target = $region100
        $region99: #{tpu_custom_call.1} parent=95 // pred_region
          %s1008 = sand.u32 %s288, 1
          %s1009 = scalar_lea.sflag [#allocation4], %s1008
          %s1010 = sand.u32 %s288, 1
          %s1011 = smul.addr %s1010, 8
          %s1012 = scalar_lea.vmem [#allocation13], %s1011
          %1014 = dma.done %s1009, 128
        $region100: #{tpu_custom_call.1} parent=95 // pred_fallthru
          _
      $region96: #{tpu_custom_call.1} parent=5 // pred_fallthru
        _
    $region6: #{tpu_custom_call.1} parent=1 // loop_footer
      %s32 = sadd.s32 1, %s28
    $region7: #{tpu_custom_call.1} parent=1 // loop_footer_branch
      %27 = sbr.rel target = $region3
    $region8: #{tpu_custom_call.1} parent=1 // loop_exit
      _
    %1015 = vsyncpa [#allocation3], 1
    %s1016 = scalar_lea.sflag [#allocation3], 1
    %1017 = vsyncpa %s1016, 1
    %1018 = vsyncpa [#allocation6], 1
    %s1019 = scalar_lea.sflag [#allocation6], 1
    %1020 = vsyncpa %s1019, 1
    %1021 = vsyncpa [#allocation9], 1
    %1022 = vsyncpa [#allocation12], 1
    %1023 = vsyncpa [#allocation4], 1
    %s1024 = scalar_lea.sflag [#allocation4], 1
    %1025 = vsyncpa %s1024, 1

</llo_original>
